<compile_context>
chip_gen: v6e
topology: v6e:2x2x1
jax: 0.10.0
libtpu: 0.0.40
codegen_flags: <defaults>
</compile_context>

<pallas_src>
import numpy as np
import jax
import jax.numpy as jnp
from jax.experimental import pallas as pl
from jax.experimental.pallas import tpu as pltpu

# Fixed anchor indices from the module's __init__ (compile-time constants).
VERT_IDX = np.array(
    [1382, 1522, 1541, 1667, 1493, 428, 179, 1806, 2289, 2408, 2405, 2442,
     19, 2504, 3016, 3164, 3049, 3060, 364, 626, 3454, 3756, 3863, 3844,
     3915, 0, 0, 0, 0, 0, 0, 0, 2420, 2332, 2131, 2241, 3129, 3133, 2895,
     3005, 3815, 3778, 3644, 3713, 0, 0],
    dtype=np.int32,
)
N_ANCHORS = VERT_IDX.shape[0]          # 46
N_VERTS = 4040
N_COORD = 3
FLAT_IN = N_VERTS * N_COORD            # 12120
FLAT_OUT = N_ANCHORS * N_COORD         # 138
LANE = 128
CLUSTER_GAP = 256                      # vertices; yields 5 windows
MAX_B_TILE = 256                       # batch rows per grid step


def _round_up(x, m):
    return ((x + m - 1) // m) * m


def _build_plan():
    """Cluster unique anchor vertices into contiguous, lane-aligned windows."""
    uniq = sorted(set(int(v) for v in VERT_IDX.tolist()))
    clusters = [[uniq[0]]]
    for v in uniq[1:]:
        if v - clusters[-1][-1] > CLUSTER_GAP:
            clusters.append([v])
        else:
            clusters[-1].append(v)

    win_start, win_width = [], []
    for c in clusters:
        lo = (c[0] * N_COORD) // LANE * LANE                    # align down
        hi = _round_up(c[-1] * N_COORD + N_COORD, LANE)         # align up
        assert 0 <= lo < hi <= FLAT_IN
        win_start.append(lo)
        win_width.append(hi - lo)

    # Map every anchor slot to (window, local column inside that window),
    # deduplicating repeated vertices (vertex 0 appears 9 times).
    groups = {}
    for a, v in enumerate(VERT_IDX.tolist()):
        for w, c in enumerate(clusters):
            if c[0] <= v <= c[-1]:
                key = (w, v * N_COORD - win_start[w])
                groups.setdefault(key, []).append(a)
                break
        else:
            raise AssertionError("vertex not covered by any window")
    gather_groups = tuple((w, loc, tuple(slots))
                          for (w, loc), slots in groups.items())
    assert sum(len(s) for _, _, s in gather_groups) == N_ANCHORS
    return tuple(win_start), tuple(win_width), gather_groups


WIN_START, WIN_WIDTH, GATHER_GROUPS = _build_plan()
N_WIN = len(WIN_START)                 # 5
STAGED_FLOATS = sum(WIN_WIDTH)         # 7168 (56 * 128) floats per row


def _make_kernel(b_tile, n_rows):
    """Kernel closure over the static tile size and total row count."""

    def kernel(v_hbm, o_hbm, *scratch):
        # v_hbm : HBM f32[n_rows, 12120]   (raw ref, no auto-DMA)
        # o_hbm : HBM f32[n_rows, 138]     (raw ref, written via DMA)
        bufs = scratch[:N_WIN]             # N_WIN x VMEM (2, b_tile, w)
        obuf = scratch[N_WIN]              # VMEM (b_tile, 138)
        in_sems = scratch[N_WIN + 1]       # DMA sems (2, N_WIN)
        out_sem = scratch[N_WIN + 2]       # DMA sem ()

        i = pl.program_id(0)
        nsteps = pl.num_programs(0)
        slot = i % 2

        def row0(step):
            # Clamp the (possibly ragged) last tile so DMAs never go out of
            # bounds; overlapped rows are recomputed with identical values.
            return jnp.minimum(step * b_tile, n_rows - b_tile)

        def in_copy(w, step, slot_):
            return pltpu.make_async_copy(
                v_hbm.at[pl.ds(row0(step), b_tile),
                         pl.ds(WIN_START[w], WIN_WIDTH[w])],
                bufs[w].at[slot_],
                in_sems.at[slot_, w])

        def start_in(step, slot_):
            for w in range(N_WIN):
                in_copy(w, step, slot_).start()

        def wait_in(slot_):
            for w in range(N_WIN):
                in_copy(w, 0, slot_).wait()

        def out_copy(step):
            return pltpu.make_async_copy(
                obuf, o_hbm.at[pl.ds(row0(step), b_tile)], out_sem)

        # --- double-buffered input pipeline --------------------------------
        @pl.when(i == 0)
        def _():                           # prime slot 0 with the first tile
            start_in(0, 0)

        @pl.when(i + 1 < nsteps)
        def _():                           # prefetch next tile's windows
            start_in(i + 1, 1 - slot)

        @pl.when(i > 0)
        def _():                           # release obuf (prev out-DMA done)
            out_copy(0).wait()

        wait_in(slot)                      # current tile's windows are ready

        # --- static, fully unrolled gather into the staging buffer ---------
        def extract(slot_static):
            for w, loc, anchors in GATHER_GROUPS:
                row = bufs[w][slot_static, :, loc:loc + N_COORD]  # (b_tile,3)
                for a in anchors:
                    dst = a * N_COORD
                    obuf[:, dst:dst + N_COORD] = row

        @pl.when(slot == 0)
        def _():
            extract(0)

        @pl.when(slot == 1)
        def _():
            extract(1)

        out_copy(i).start()                # tiny writeback; waited next step

        @pl.when(i == nsteps - 1)
        def _():                           # drain the last output DMA
            out_copy(0).wait()

    return kernel


def leap_anchor(vertices: jax.Array, *, max_rows_per_step: int = MAX_B_TILE
                ) -> jax.Array:
    """vertices: f32[N, 4040, 3] -> anchor_pos: f32[N, 46, 3]"""
    n = vertices.shape[0]
    assert vertices.shape[1] == N_VERTS and vertices.shape[2] == N_COORD
    dtype = vertices.dtype
    if n == 0:
        return jnp.zeros((0, N_ANCHORS, N_COORD), dtype)

    # Flatten the coord axis (contiguous reshape): lane-dense rows of 12120.
    v_flat = vertices.reshape(n, FLAT_IN)

    # Balanced tile size <= max_rows_per_step; no padding of the batch.
    nsteps = -(-n // max_rows_per_step)
    b_tile = -(-n // nsteps)
    b_tile = min(_round_up(b_tile, 8), n)      # sublane-friendly when possible
    nsteps = -(-n // b_tile)

    scratch = [pltpu.VMEM((2, b_tile, w), dtype) for w in WIN_WIDTH]
    scratch += [pltpu.VMEM((b_tile, FLAT_OUT), dtype),
                pltpu.SemaphoreType.DMA((2, N_WIN)),
                pltpu.SemaphoreType.DMA(())]

    out_flat = pl.pallas_call(
        _make_kernel(b_tile, n),
        out_shape=jax.ShapeDtypeStruct((n, FLAT_OUT), dtype),
        grid=(nsteps,),
        in_specs=[pl.BlockSpec(memory_space=pl.ANY)],
        out_specs=pl.BlockSpec(memory_space=pl.ANY),
        scratch_shapes=scratch,
        compiler_params=pltpu.CompilerParams(
            # Sequential grid: required by the cross-step double buffer; a
            # single TC's DMAs already saturate HBM for this pure-DMA kernel.
            dimension_semantics=("arbitrary",),
            vmem_limit_bytes=32 * 1024 * 1024),
        cost_estimate=pl.CostEstimate(
            flops=0, transcendentals=0,
            bytes_accessed=n * 4 * (STAGED_FLOATS + FLAT_OUT)),
    )(v_flat)

    return out_flat.reshape(n, N_ANCHORS, N_COORD)


if __name__ == "__main__":
    key = jax.random.PRNGKey(0)
    idx = jnp.asarray(VERT_IDX)

    # Small shape consistent with the module's forward contract.
    n_batch = 2
    vertices = jax.random.normal(key, (n_batch, N_VERTS, N_COORD),
                                 dtype=jnp.float32)
    anchor_pos = jax.block_until_ready(leap_anchor(vertices))
    ref = jnp.take(vertices, idx, axis=1)
    assert anchor_pos.shape == (n_batch, N_ANCHORS, N_COORD)
    np.testing.assert_allclose(np.asarray(anchor_pos), np.asarray(ref),
                               rtol=0, atol=0)

    # Exercise the multi-step, ragged-tail (clamped) path with a tiny tile.
    key2 = jax.random.PRNGKey(1)
    n_batch2 = 19
    vertices2 = jax.random.normal(key2, (n_batch2, N_VERTS, N_COORD),
                                  dtype=jnp.float32)
    anchor_pos2 = jax.block_until_ready(
        leap_anchor(vertices2, max_rows_per_step=8))
    ref2 = jnp.take(vertices2, idx, axis=1)
    np.testing.assert_allclose(np.asarray(anchor_pos2), np.asarray(ref2),
                               rtol=0, atol=0)

    print("KERNEL_OK")
</pallas_src>

<mosaic_0001>
module attributes {stable_mosaic.version = 11 : i64} {
  func.func @kernel(%arg0: i32, %arg1: memref<2x12120xf32, #tpu.memory_space<any>>, %arg2: memref<2x138xf32, #tpu.memory_space<any>>, %arg3: memref<2x2x1920xf32, #tpu.memory_space<vmem>>, %arg4: memref<2x2x1408xf32, #tpu.memory_space<vmem>>, %arg5: memref<2x2x1280xf32, #tpu.memory_space<vmem>>, %arg6: memref<2x2x1024xf32, #tpu.memory_space<vmem>>, %arg7: memref<2x2x1536xf32, #tpu.memory_space<vmem>>, %arg8: memref<2x138xf32, #tpu.memory_space<vmem>>, %arg9: memref<2x5x!tpu.dma_semaphore, #tpu.memory_space<semaphore_mem>>, %arg10: memref<!tpu.dma_semaphore, #tpu.memory_space<semaphore_mem>>) attributes {dimension_semantics = [#tpu.dimension_semantics<arbitrary>], iteration_bounds = array<i64: 1>, scalar_prefetch = 0 : i64, scratch_operands = 8 : i64, tpu.core_type = #tpu.core_type<tc>, window_params = [{}, {}]} {
    %c2_i32 = arith.constant 2 : i32
    %c0_i32 = arith.constant 0 : i32
    %0 = arith.cmpi eq, %c2_i32, %c0_i32 : i32
    %c1_i32 = arith.constant 1 : i32
    %1 = arith.select %0, %c1_i32, %c2_i32 : i32
    %2 = arith.remsi %arg0, %1 : i32
    %c0_i32_0 = arith.constant 0 : i32
    %3 = arith.cmpi ne, %2, %c0_i32_0 : i32
    %c0_i32_1 = arith.constant 0 : i32
    %4 = arith.cmpi slt, %2, %c0_i32_1 : i32
    %c0_i32_2 = arith.constant 0 : i32
    %5 = arith.cmpi slt, %1, %c0_i32_2 : i32
    %6 = arith.xori %4, %5 : i1
    %7 = arith.andi %6, %3 : i1
    %8 = arith.addi %2, %1 : i32
    %9 = arith.select %7, %8, %2 : i32
    %c0_i32_3 = arith.constant 0 : i32
    %10 = arith.cmpi eq, %arg0, %c0_i32_3 : i32
    %11 = arith.extui %10 : i1 to i32
    %c0_i32_4 = arith.constant 0 : i32
    %12 = arith.cmpi ne, %11, %c0_i32_4 : i32
    scf.if %12 {
      %c0_i32_43 = arith.constant 0 : i32
      %c0_i32_44 = arith.constant 0 : i32
      %62 = arith.minsi %c0_i32_43, %c0_i32_44 : i32
      %c0_i32_45 = arith.constant 0 : i32
      %c0_i32_46 = arith.constant 0 : i32
      %c0_i32_47 = arith.constant 0 : i32
      %c0_i32_48 = arith.constant 0 : i32
      %63 = tpu.memref_slice %arg1[%62, %c0_i32_48] : memref<2x12120xf32, #tpu.memory_space<any>> -> memref<2x1920xf32, #tpu.memory_space<any>>
      %c0_i32_49 = arith.constant 0 : i32
      %c0_i32_50 = arith.constant 0 : i32
      %64 = tpu.memref_slice %arg3[%c0_i32_45, %c0_i32_49, %c0_i32_50] : memref<2x2x1920xf32, #tpu.memory_space<vmem>> -> memref<1x2x1920xf32, #tpu.memory_space<vmem>>
      %65 = tpu.memref_squeeze %64 : memref<1x2x1920xf32, #tpu.memory_space<vmem>> -> memref<2x1920xf32, #tpu.memory_space<vmem>>
      %66 = tpu.memref_slice %arg9[%c0_i32_46, %c0_i32_47] : memref<2x5x!tpu.dma_semaphore, #tpu.memory_space<semaphore_mem>> -> memref<1x1x!tpu.dma_semaphore, #tpu.memory_space<semaphore_mem>>
      %67 = tpu.memref_squeeze %66 : memref<1x1x!tpu.dma_semaphore, #tpu.memory_space<semaphore_mem>> -> memref<!tpu.dma_semaphore, #tpu.memory_space<semaphore_mem>>
      tpu.enqueue_dma source(%63 : memref<2x1920xf32, #tpu.memory_space<any>>) target(%65 : memref<2x1920xf32, #tpu.memory_space<vmem>>) target_semaphore(%67 : memref<!tpu.dma_semaphore, #tpu.memory_space<semaphore_mem>>)
      %c0_i32_51 = arith.constant 0 : i32
      %c0_i32_52 = arith.constant 0 : i32
      %68 = arith.minsi %c0_i32_51, %c0_i32_52 : i32
      %c0_i32_53 = arith.constant 0 : i32
      %c0_i32_54 = arith.constant 0 : i32
      %c1_i32_55 = arith.constant 1 : i32
      %c4096_i32_56 = arith.constant 4096 : i32
      %69 = tpu.memref_slice %arg1[%68, %c4096_i32_56] : memref<2x12120xf32, #tpu.memory_space<any>> -> memref<2x1408xf32, #tpu.memory_space<any>>
      %c0_i32_57 = arith.constant 0 : i32
      %c0_i32_58 = arith.constant 0 : i32
      %70 = tpu.memref_slice %arg4[%c0_i32_53, %c0_i32_57, %c0_i32_58] : memref<2x2x1408xf32, #tpu.memory_space<vmem>> -> memref<1x2x1408xf32, #tpu.memory_space<vmem>>
      %71 = tpu.memref_squeeze %70 : memref<1x2x1408xf32, #tpu.memory_space<vmem>> -> memref<2x1408xf32, #tpu.memory_space<vmem>>
      %72 = tpu.memref_slice %arg9[%c0_i32_54, %c1_i32_55] : memref<2x5x!tpu.dma_semaphore, #tpu.memory_space<semaphore_mem>> -> memref<1x1x!tpu.dma_semaphore, #tpu.memory_space<semaphore_mem>>
      %73 = tpu.memref_squeeze %72 : memref<1x1x!tpu.dma_semaphore, #tpu.memory_space<semaphore_mem>> -> memref<!tpu.dma_semaphore, #tpu.memory_space<semaphore_mem>>
      tpu.enqueue_dma source(%69 : memref<2x1408xf32, #tpu.memory_space<any>>) target(%71 : memref<2x1408xf32, #tpu.memory_space<vmem>>) target_semaphore(%73 : memref<!tpu.dma_semaphore, #tpu.memory_space<semaphore_mem>>)
      %c0_i32_59 = arith.constant 0 : i32
      %c0_i32_60 = arith.constant 0 : i32
      %74 = arith.minsi %c0_i32_59, %c0_i32_60 : i32
      %c0_i32_61 = arith.constant 0 : i32
      %c0_i32_62 = arith.constant 0 : i32
      %c2_i32_63 = arith.constant 2 : i32
      %c6272_i32_64 = arith.constant 6272 : i32
      %75 = tpu.memref_slice %arg1[%74, %c6272_i32_64] : memref<2x12120xf32, #tpu.memory_space<any>> -> memref<2x1280xf32, #tpu.memory_space<any>>
      %c0_i32_65 = arith.constant 0 : i32
      %c0_i32_66 = arith.constant 0 : i32
      %76 = tpu.memref_slice %arg5[%c0_i32_61, %c0_i32_65, %c0_i32_66] : memref<2x2x1280xf32, #tpu.memory_space<vmem>> -> memref<1x2x1280xf32, #tpu.memory_space<vmem>>
      %77 = tpu.memref_squeeze %76 : memref<1x2x1280xf32, #tpu.memory_space<vmem>> -> memref<2x1280xf32, #tpu.memory_space<vmem>>
      %78 = tpu.memref_slice %arg9[%c0_i32_62, %c2_i32_63] : memref<2x5x!tpu.dma_semaphore, #tpu.memory_space<semaphore_mem>> -> memref<1x1x!tpu.dma_semaphore, #tpu.memory_space<semaphore_mem>>
      %79 = tpu.memref_squeeze %78 : memref<1x1x!tpu.dma_semaphore, #tpu.memory_space<semaphore_mem>> -> memref<!tpu.dma_semaphore, #tpu.memory_space<semaphore_mem>>
      tpu.enqueue_dma source(%75 : memref<2x1280xf32, #tpu.memory_space<any>>) target(%77 : memref<2x1280xf32, #tpu.memory_space<vmem>>) target_semaphore(%79 : memref<!tpu.dma_semaphore, #tpu.memory_space<semaphore_mem>>)
      %c0_i32_67 = arith.constant 0 : i32
      %c0_i32_68 = arith.constant 0 : i32
      %80 = arith.minsi %c0_i32_67, %c0_i32_68 : i32
      %c0_i32_69 = arith.constant 0 : i32
      %c0_i32_70 = arith.constant 0 : i32
      %c3_i32_71 = arith.constant 3 : i32
      %c8576_i32_72 = arith.constant 8576 : i32
      %81 = tpu.memref_slice %arg1[%80, %c8576_i32_72] : memref<2x12120xf32, #tpu.memory_space<any>> -> memref<2x1024xf32, #tpu.memory_space<any>>
      %c0_i32_73 = arith.constant 0 : i32
      %c0_i32_74 = arith.constant 0 : i32
      %82 = tpu.memref_slice %arg6[%c0_i32_69, %c0_i32_73, %c0_i32_74] : memref<2x2x1024xf32, #tpu.memory_space<vmem>> -> memref<1x2x1024xf32, #tpu.memory_space<vmem>>
      %83 = tpu.memref_squeeze %82 : memref<1x2x1024xf32, #tpu.memory_space<vmem>> -> memref<2x1024xf32, #tpu.memory_space<vmem>>
      %84 = tpu.memref_slice %arg9[%c0_i32_70, %c3_i32_71] : memref<2x5x!tpu.dma_semaphore, #tpu.memory_space<semaphore_mem>> -> memref<1x1x!tpu.dma_semaphore, #tpu.memory_space<semaphore_mem>>
      %85 = tpu.memref_squeeze %84 : memref<1x1x!tpu.dma_semaphore, #tpu.memory_space<semaphore_mem>> -> memref<!tpu.dma_semaphore, #tpu.memory_space<semaphore_mem>>
      tpu.enqueue_dma source(%81 : memref<2x1024xf32, #tpu.memory_space<any>>) target(%83 : memref<2x1024xf32, #tpu.memory_space<vmem>>) target_semaphore(%85 : memref<!tpu.dma_semaphore, #tpu.memory_space<semaphore_mem>>)
      %c0_i32_75 = arith.constant 0 : i32
      %c0_i32_76 = arith.constant 0 : i32
      %86 = arith.minsi %c0_i32_75, %c0_i32_76 : i32
      %c0_i32_77 = arith.constant 0 : i32
      %c0_i32_78 = arith.constant 0 : i32
      %c4_i32_79 = arith.constant 4 : i32
      %c10240_i32_80 = arith.constant 10240 : i32
      %87 = tpu.memref_slice %arg1[%86, %c10240_i32_80] : memref<2x12120xf32, #tpu.memory_space<any>> -> memref<2x1536xf32, #tpu.memory_space<any>>
      %c0_i32_81 = arith.constant 0 : i32
      %c0_i32_82 = arith.constant 0 : i32
      %88 = tpu.memref_slice %arg7[%c0_i32_77, %c0_i32_81, %c0_i32_82] : memref<2x2x1536xf32, #tpu.memory_space<vmem>> -> memref<1x2x1536xf32, #tpu.memory_space<vmem>>
      %89 = tpu.memref_squeeze %88 : memref<1x2x1536xf32, #tpu.memory_space<vmem>> -> memref<2x1536xf32, #tpu.memory_space<vmem>>
      %90 = tpu.memref_slice %arg9[%c0_i32_78, %c4_i32_79] : memref<2x5x!tpu.dma_semaphore, #tpu.memory_space<semaphore_mem>> -> memref<1x1x!tpu.dma_semaphore, #tpu.memory_space<semaphore_mem>>
      %91 = tpu.memref_squeeze %90 : memref<1x1x!tpu.dma_semaphore, #tpu.memory_space<semaphore_mem>> -> memref<!tpu.dma_semaphore, #tpu.memory_space<semaphore_mem>>
      tpu.enqueue_dma source(%87 : memref<2x1536xf32, #tpu.memory_space<any>>) target(%89 : memref<2x1536xf32, #tpu.memory_space<vmem>>) target_semaphore(%91 : memref<!tpu.dma_semaphore, #tpu.memory_space<semaphore_mem>>)
    } else {
    }
    %c1_i32_5 = arith.constant 1 : i32
    %13 = arith.addi %arg0, %c1_i32_5 : i32
    %c1_i32_6 = arith.constant 1 : i32
    %14 = arith.cmpi slt, %13, %c1_i32_6 : i32
    %15 = arith.extui %14 : i1 to i32
    %c0_i32_7 = arith.constant 0 : i32
    %16 = arith.cmpi ne, %15, %c0_i32_7 : i32
    scf.if %16 {
      %c1_i32_43 = arith.constant 1 : i32
      %62 = arith.addi %arg0, %c1_i32_43 : i32
      %c1_i32_44 = arith.constant 1 : i32
      %63 = arith.subi %c1_i32_44, %9 : i32
      %c2_i32_45 = arith.constant 2 : i32
      %64 = arith.muli %62, %c2_i32_45 : i32
      %c0_i32_46 = arith.constant 0 : i32
      %65 = arith.minsi %64, %c0_i32_46 : i32
      %c0_i32_47 = arith.constant 0 : i32
      %c0_i32_48 = arith.constant 0 : i32
      %66 = tpu.memref_slice %arg1[%65, %c0_i32_48] : memref<2x12120xf32, #tpu.memory_space<any>> -> memref<2x1920xf32, #tpu.memory_space<any>>
      %c0_i32_49 = arith.constant 0 : i32
      %c0_i32_50 = arith.constant 0 : i32
      %67 = tpu.memref_slice %arg3[%63, %c0_i32_49, %c0_i32_50] : memref<2x2x1920xf32, #tpu.memory_space<vmem>> -> memref<1x2x1920xf32, #tpu.memory_space<vmem>>
      %68 = tpu.memref_squeeze %67 : memref<1x2x1920xf32, #tpu.memory_space<vmem>> -> memref<2x1920xf32, #tpu.memory_space<vmem>>
      %69 = tpu.memref_slice %arg9[%63, %c0_i32_47] : memref<2x5x!tpu.dma_semaphore, #tpu.memory_space<semaphore_mem>> -> memref<1x1x!tpu.dma_semaphore, #tpu.memory_space<semaphore_mem>>
      %70 = tpu.memref_squeeze %69 : memref<1x1x!tpu.dma_semaphore, #tpu.memory_space<semaphore_mem>> -> memref<!tpu.dma_semaphore, #tpu.memory_space<semaphore_mem>>
      tpu.enqueue_dma source(%66 : memref<2x1920xf32, #tpu.memory_space<any>>) target(%68 : memref<2x1920xf32, #tpu.memory_space<vmem>>) target_semaphore(%70 : memref<!tpu.dma_semaphore, #tpu.memory_space<semaphore_mem>>)
      %c2_i32_51 = arith.constant 2 : i32
      %71 = arith.muli %62, %c2_i32_51 : i32
      %c0_i32_52 = arith.constant 0 : i32
      %72 = arith.minsi %71, %c0_i32_52 : i32
      %c1_i32_53 = arith.constant 1 : i32
      %c4096_i32_54 = arith.constant 4096 : i32
      %73 = tpu.memref_slice %arg1[%72, %c4096_i32_54] : memref<2x12120xf32, #tpu.memory_space<any>> -> memref<2x1408xf32, #tpu.memory_space<any>>
      %c0_i32_55 = arith.constant 0 : i32
      %c0_i32_56 = arith.constant 0 : i32
      %74 = tpu.memref_slice %arg4[%63, %c0_i32_55, %c0_i32_56] : memref<2x2x1408xf32, #tpu.memory_space<vmem>> -> memref<1x2x1408xf32, #tpu.memory_space<vmem>>
      %75 = tpu.memref_squeeze %74 : memref<1x2x1408xf32, #tpu.memory_space<vmem>> -> memref<2x1408xf32, #tpu.memory_space<vmem>>
      %76 = tpu.memref_slice %arg9[%63, %c1_i32_53] : memref<2x5x!tpu.dma_semaphore, #tpu.memory_space<semaphore_mem>> -> memref<1x1x!tpu.dma_semaphore, #tpu.memory_space<semaphore_mem>>
      %77 = tpu.memref_squeeze %76 : memref<1x1x!tpu.dma_semaphore, #tpu.memory_space<semaphore_mem>> -> memref<!tpu.dma_semaphore, #tpu.memory_space<semaphore_mem>>
      tpu.enqueue_dma source(%73 : memref<2x1408xf32, #tpu.memory_space<any>>) target(%75 : memref<2x1408xf32, #tpu.memory_space<vmem>>) target_semaphore(%77 : memref<!tpu.dma_semaphore, #tpu.memory_space<semaphore_mem>>)
      %c2_i32_57 = arith.constant 2 : i32
      %78 = arith.muli %62, %c2_i32_57 : i32
      %c0_i32_58 = arith.constant 0 : i32
      %79 = arith.minsi %78, %c0_i32_58 : i32
      %c2_i32_59 = arith.constant 2 : i32
      %c6272_i32_60 = arith.constant 6272 : i32
      %80 = tpu.memref_slice %arg1[%79, %c6272_i32_60] : memref<2x12120xf32, #tpu.memory_space<any>> -> memref<2x1280xf32, #tpu.memory_space<any>>
      %c0_i32_61 = arith.constant 0 : i32
      %c0_i32_62 = arith.constant 0 : i32
      %81 = tpu.memref_slice %arg5[%63, %c0_i32_61, %c0_i32_62] : memref<2x2x1280xf32, #tpu.memory_space<vmem>> -> memref<1x2x1280xf32, #tpu.memory_space<vmem>>
      %82 = tpu.memref_squeeze %81 : memref<1x2x1280xf32, #tpu.memory_space<vmem>> -> memref<2x1280xf32, #tpu.memory_space<vmem>>
      %83 = tpu.memref_slice %arg9[%63, %c2_i32_59] : memref<2x5x!tpu.dma_semaphore, #tpu.memory_space<semaphore_mem>> -> memref<1x1x!tpu.dma_semaphore, #tpu.memory_space<semaphore_mem>>
      %84 = tpu.memref_squeeze %83 : memref<1x1x!tpu.dma_semaphore, #tpu.memory_space<semaphore_mem>> -> memref<!tpu.dma_semaphore, #tpu.memory_space<semaphore_mem>>
      tpu.enqueue_dma source(%80 : memref<2x1280xf32, #tpu.memory_space<any>>) target(%82 : memref<2x1280xf32, #tpu.memory_space<vmem>>) target_semaphore(%84 : memref<!tpu.dma_semaphore, #tpu.memory_space<semaphore_mem>>)
      %c2_i32_63 = arith.constant 2 : i32
      %85 = arith.muli %62, %c2_i32_63 : i32
      %c0_i32_64 = arith.constant 0 : i32
      %86 = arith.minsi %85, %c0_i32_64 : i32
      %c3_i32_65 = arith.constant 3 : i32
      %c8576_i32_66 = arith.constant 8576 : i32
      %87 = tpu.memref_slice %arg1[%86, %c8576_i32_66] : memref<2x12120xf32, #tpu.memory_space<any>> -> memref<2x1024xf32, #tpu.memory_space<any>>
      %c0_i32_67 = arith.constant 0 : i32
      %c0_i32_68 = arith.constant 0 : i32
      %88 = tpu.memref_slice %arg6[%63, %c0_i32_67, %c0_i32_68] : memref<2x2x1024xf32, #tpu.memory_space<vmem>> -> memref<1x2x1024xf32, #tpu.memory_space<vmem>>
      %89 = tpu.memref_squeeze %88 : memref<1x2x1024xf32, #tpu.memory_space<vmem>> -> memref<2x1024xf32, #tpu.memory_space<vmem>>
      %90 = tpu.memref_slice %arg9[%63, %c3_i32_65] : memref<2x5x!tpu.dma_semaphore, #tpu.memory_space<semaphore_mem>> -> memref<1x1x!tpu.dma_semaphore, #tpu.memory_space<semaphore_mem>>
      %91 = tpu.memref_squeeze %90 : memref<1x1x!tpu.dma_semaphore, #tpu.memory_space<semaphore_mem>> -> memref<!tpu.dma_semaphore, #tpu.memory_space<semaphore_mem>>
      tpu.enqueue_dma source(%87 : memref<2x1024xf32, #tpu.memory_space<any>>) target(%89 : memref<2x1024xf32, #tpu.memory_space<vmem>>) target_semaphore(%91 : memref<!tpu.dma_semaphore, #tpu.memory_space<semaphore_mem>>)
      %c2_i32_69 = arith.constant 2 : i32
      %92 = arith.muli %62, %c2_i32_69 : i32
      %c0_i32_70 = arith.constant 0 : i32
      %93 = arith.minsi %92, %c0_i32_70 : i32
      %c4_i32_71 = arith.constant 4 : i32
      %c10240_i32_72 = arith.constant 10240 : i32
      %94 = tpu.memref_slice %arg1[%93, %c10240_i32_72] : memref<2x12120xf32, #tpu.memory_space<any>> -> memref<2x1536xf32, #tpu.memory_space<any>>
      %c0_i32_73 = arith.constant 0 : i32
      %c0_i32_74 = arith.constant 0 : i32
      %95 = tpu.memref_slice %arg7[%63, %c0_i32_73, %c0_i32_74] : memref<2x2x1536xf32, #tpu.memory_space<vmem>> -> memref<1x2x1536xf32, #tpu.memory_space<vmem>>
      %96 = tpu.memref_squeeze %95 : memref<1x2x1536xf32, #tpu.memory_space<vmem>> -> memref<2x1536xf32, #tpu.memory_space<vmem>>
      %97 = tpu.memref_slice %arg9[%63, %c4_i32_71] : memref<2x5x!tpu.dma_semaphore, #tpu.memory_space<semaphore_mem>> -> memref<1x1x!tpu.dma_semaphore, #tpu.memory_space<semaphore_mem>>
      %98 = tpu.memref_squeeze %97 : memref<1x1x!tpu.dma_semaphore, #tpu.memory_space<semaphore_mem>> -> memref<!tpu.dma_semaphore, #tpu.memory_space<semaphore_mem>>
      tpu.enqueue_dma source(%94 : memref<2x1536xf32, #tpu.memory_space<any>>) target(%96 : memref<2x1536xf32, #tpu.memory_space<vmem>>) target_semaphore(%98 : memref<!tpu.dma_semaphore, #tpu.memory_space<semaphore_mem>>)
    } else {
    }
    %c0_i32_8 = arith.constant 0 : i32
    %17 = arith.cmpi sgt, %arg0, %c0_i32_8 : i32
    %18 = arith.extui %17 : i1 to i32
    %c0_i32_9 = arith.constant 0 : i32
    %19 = arith.cmpi ne, %18, %c0_i32_9 : i32
    scf.if %19 {
      %c0_i32_43 = arith.constant 0 : i32
      %c0_i32_44 = arith.constant 0 : i32
      %62 = arith.minsi %c0_i32_43, %c0_i32_44 : i32
      %c0_i32_45 = arith.constant 0 : i32
      %63 = tpu.memref_slice %arg2[%62, %c0_i32_45] : memref<2x138xf32, #tpu.memory_space<any>> -> memref<2x138xf32, #tpu.memory_space<any>>
      tpu.wait_dma2 semaphore(%arg10 : memref<!tpu.dma_semaphore, #tpu.memory_space<semaphore_mem>>) src(%arg8 : memref<2x138xf32, #tpu.memory_space<vmem>>) dst(%63 : memref<2x138xf32, #tpu.memory_space<any>>)
    } else {
    }
    %c0_i32_10 = arith.constant 0 : i32
    %c0_i32_11 = arith.constant 0 : i32
    %20 = arith.minsi %c0_i32_10, %c0_i32_11 : i32
    %c0_i32_12 = arith.constant 0 : i32
    %c0_i32_13 = arith.constant 0 : i32
    %21 = tpu.memref_slice %arg1[%20, %c0_i32_13] : memref<2x12120xf32, #tpu.memory_space<any>> -> memref<2x1920xf32, #tpu.memory_space<any>>
    %c0_i32_14 = arith.constant 0 : i32
    %c0_i32_15 = arith.constant 0 : i32
    %22 = tpu.memref_slice %arg3[%9, %c0_i32_14, %c0_i32_15] : memref<2x2x1920xf32, #tpu.memory_space<vmem>> -> memref<1x2x1920xf32, #tpu.memory_space<vmem>>
    %23 = tpu.memref_squeeze %22 : memref<1x2x1920xf32, #tpu.memory_space<vmem>> -> memref<2x1920xf32, #tpu.memory_space<vmem>>
    %24 = tpu.memref_slice %arg9[%9, %c0_i32_12] : memref<2x5x!tpu.dma_semaphore, #tpu.memory_space<semaphore_mem>> -> memref<1x1x!tpu.dma_semaphore, #tpu.memory_space<semaphore_mem>>
    %25 = tpu.memref_squeeze %24 : memref<1x1x!tpu.dma_semaphore, #tpu.memory_space<semaphore_mem>> -> memref<!tpu.dma_semaphore, #tpu.memory_space<semaphore_mem>>
    tpu.wait_dma2 semaphore(%25 : memref<!tpu.dma_semaphore, #tpu.memory_space<semaphore_mem>>) src(%21 : memref<2x1920xf32, #tpu.memory_space<any>>) dst(%23 : memref<2x1920xf32, #tpu.memory_space<vmem>>)
    %c0_i32_16 = arith.constant 0 : i32
    %c0_i32_17 = arith.constant 0 : i32
    %26 = arith.minsi %c0_i32_16, %c0_i32_17 : i32
    %c1_i32_18 = arith.constant 1 : i32
    %c4096_i32 = arith.constant 4096 : i32
    %27 = tpu.memref_slice %arg1[%26, %c4096_i32] : memref<2x12120xf32, #tpu.memory_space<any>> -> memref<2x1408xf32, #tpu.memory_space<any>>
    %c0_i32_19 = arith.constant 0 : i32
    %c0_i32_20 = arith.constant 0 : i32
    %28 = tpu.memref_slice %arg4[%9, %c0_i32_19, %c0_i32_20] : memref<2x2x1408xf32, #tpu.memory_space<vmem>> -> memref<1x2x1408xf32, #tpu.memory_space<vmem>>
    %29 = tpu.memref_squeeze %28 : memref<1x2x1408xf32, #tpu.memory_space<vmem>> -> memref<2x1408xf32, #tpu.memory_space<vmem>>
    %30 = tpu.memref_slice %arg9[%9, %c1_i32_18] : memref<2x5x!tpu.dma_semaphore, #tpu.memory_space<semaphore_mem>> -> memref<1x1x!tpu.dma_semaphore, #tpu.memory_space<semaphore_mem>>
    %31 = tpu.memref_squeeze %30 : memref<1x1x!tpu.dma_semaphore, #tpu.memory_space<semaphore_mem>> -> memref<!tpu.dma_semaphore, #tpu.memory_space<semaphore_mem>>
    tpu.wait_dma2 semaphore(%31 : memref<!tpu.dma_semaphore, #tpu.memory_space<semaphore_mem>>) src(%27 : memref<2x1408xf32, #tpu.memory_space<any>>) dst(%29 : memref<2x1408xf32, #tpu.memory_space<vmem>>)
    %c0_i32_21 = arith.constant 0 : i32
    %c0_i32_22 = arith.constant 0 : i32
    %32 = arith.minsi %c0_i32_21, %c0_i32_22 : i32
    %c2_i32_23 = arith.constant 2 : i32
    %c6272_i32 = arith.constant 6272 : i32
    %33 = tpu.memref_slice %arg1[%32, %c6272_i32] : memref<2x12120xf32, #tpu.memory_space<any>> -> memref<2x1280xf32, #tpu.memory_space<any>>
    %c0_i32_24 = arith.constant 0 : i32
    %c0_i32_25 = arith.constant 0 : i32
    %34 = tpu.memref_slice %arg5[%9, %c0_i32_24, %c0_i32_25] : memref<2x2x1280xf32, #tpu.memory_space<vmem>> -> memref<1x2x1280xf32, #tpu.memory_space<vmem>>
    %35 = tpu.memref_squeeze %34 : memref<1x2x1280xf32, #tpu.memory_space<vmem>> -> memref<2x1280xf32, #tpu.memory_space<vmem>>
    %36 = tpu.memref_slice %arg9[%9, %c2_i32_23] : memref<2x5x!tpu.dma_semaphore, #tpu.memory_space<semaphore_mem>> -> memref<1x1x!tpu.dma_semaphore, #tpu.memory_space<semaphore_mem>>
    %37 = tpu.memref_squeeze %36 : memref<1x1x!tpu.dma_semaphore, #tpu.memory_space<semaphore_mem>> -> memref<!tpu.dma_semaphore, #tpu.memory_space<semaphore_mem>>
    tpu.wait_dma2 semaphore(%37 : memref<!tpu.dma_semaphore, #tpu.memory_space<semaphore_mem>>) src(%33 : memref<2x1280xf32, #tpu.memory_space<any>>) dst(%35 : memref<2x1280xf32, #tpu.memory_space<vmem>>)
    %c0_i32_26 = arith.constant 0 : i32
    %c0_i32_27 = arith.constant 0 : i32
    %38 = arith.minsi %c0_i32_26, %c0_i32_27 : i32
    %c3_i32 = arith.constant 3 : i32
    %c8576_i32 = arith.constant 8576 : i32
    %39 = tpu.memref_slice %arg1[%38, %c8576_i32] : memref<2x12120xf32, #tpu.memory_space<any>> -> memref<2x1024xf32, #tpu.memory_space<any>>
    %c0_i32_28 = arith.constant 0 : i32
    %c0_i32_29 = arith.constant 0 : i32
    %40 = tpu.memref_slice %arg6[%9, %c0_i32_28, %c0_i32_29] : memref<2x2x1024xf32, #tpu.memory_space<vmem>> -> memref<1x2x1024xf32, #tpu.memory_space<vmem>>
    %41 = tpu.memref_squeeze %40 : memref<1x2x1024xf32, #tpu.memory_space<vmem>> -> memref<2x1024xf32, #tpu.memory_space<vmem>>
    %42 = tpu.memref_slice %arg9[%9, %c3_i32] : memref<2x5x!tpu.dma_semaphore, #tpu.memory_space<semaphore_mem>> -> memref<1x1x!tpu.dma_semaphore, #tpu.memory_space<semaphore_mem>>
    %43 = tpu.memref_squeeze %42 : memref<1x1x!tpu.dma_semaphore, #tpu.memory_space<semaphore_mem>> -> memref<!tpu.dma_semaphore, #tpu.memory_space<semaphore_mem>>
    tpu.wait_dma2 semaphore(%43 : memref<!tpu.dma_semaphore, #tpu.memory_space<semaphore_mem>>) src(%39 : memref<2x1024xf32, #tpu.memory_space<any>>) dst(%41 : memref<2x1024xf32, #tpu.memory_space<vmem>>)
    %c0_i32_30 = arith.constant 0 : i32
    %c0_i32_31 = arith.constant 0 : i32
    %44 = arith.minsi %c0_i32_30, %c0_i32_31 : i32
    %c4_i32 = arith.constant 4 : i32
    %c10240_i32 = arith.constant 10240 : i32
    %45 = tpu.memref_slice %arg1[%44, %c10240_i32] : memref<2x12120xf32, #tpu.memory_space<any>> -> memref<2x1536xf32, #tpu.memory_space<any>>
    %c0_i32_32 = arith.constant 0 : i32
    %c0_i32_33 = arith.constant 0 : i32
    %46 = tpu.memref_slice %arg7[%9, %c0_i32_32, %c0_i32_33] : memref<2x2x1536xf32, #tpu.memory_space<vmem>> -> memref<1x2x1536xf32, #tpu.memory_space<vmem>>
    %47 = tpu.memref_squeeze %46 : memref<1x2x1536xf32, #tpu.memory_space<vmem>> -> memref<2x1536xf32, #tpu.memory_space<vmem>>
    %48 = tpu.memref_slice %arg9[%9, %c4_i32] : memref<2x5x!tpu.dma_semaphore, #tpu.memory_space<semaphore_mem>> -> memref<1x1x!tpu.dma_semaphore, #tpu.memory_space<semaphore_mem>>
    %49 = tpu.memref_squeeze %48 : memref<1x1x!tpu.dma_semaphore, #tpu.memory_space<semaphore_mem>> -> memref<!tpu.dma_semaphore, #tpu.memory_space<semaphore_mem>>
    tpu.wait_dma2 semaphore(%49 : memref<!tpu.dma_semaphore, #tpu.memory_space<semaphore_mem>>) src(%45 : memref<2x1536xf32, #tpu.memory_space<any>>) dst(%47 : memref<2x1536xf32, #tpu.memory_space<vmem>>)
    %c0_i32_34 = arith.constant 0 : i32
    %50 = arith.cmpi eq, %9, %c0_i32_34 : i32
    %51 = arith.extui %50 : i1 to i32
    %c0_i32_35 = arith.constant 0 : i32
    %52 = arith.cmpi ne, %51, %c0_i32_35 : i32
    scf.if %52 {
      %c0 = arith.constant 0 : index
      %c0_43 = arith.constant 0 : index
      %c50 = arith.constant 50 : index
      %62 = vector.load %arg4[%c0, %c0_43, %c50] : memref<2x2x1408xf32, #tpu.memory_space<vmem>>, vector<1x2x3xf32>
      %63 = vector.shape_cast %62 : vector<1x2x3xf32> to vector<2x3xf32>
      %c0_44 = arith.constant 0 : index
      %c0_45 = arith.constant 0 : index
      %64 = vector.load %arg8[%c0_44, %c0_45] : memref<2x138xf32, #tpu.memory_space<vmem>>, vector<2x3xf32>
      tpu.vector_store %arg8[%c0_44, %c0_45], %63 {strides = array<i32>} : memref<2x138xf32, #tpu.memory_space<vmem>>, vector<2x3xf32>,
      %c0_46 = arith.constant 0 : index
      %c0_47 = arith.constant 0 : index
      %c470 = arith.constant 470 : index
      %65 = vector.load %arg4[%c0_46, %c0_47, %c470] : memref<2x2x1408xf32, #tpu.memory_space<vmem>>, vector<1x2x3xf32>
      %66 = vector.shape_cast %65 : vector<1x2x3xf32> to vector<2x3xf32>
      %c0_48 = arith.constant 0 : index
      %c3 = arith.constant 3 : index
      %67 = vector.load %arg8[%c0_48, %c3] : memref<2x138xf32, #tpu.memory_space<vmem>>, vector<2x3xf32>
      tpu.vector_store %arg8[%c0_48, %c3], %66 {strides = array<i32>} : memref<2x138xf32, #tpu.memory_space<vmem>>, vector<2x3xf32>,
      %c0_49 = arith.constant 0 : index
      %c0_50 = arith.constant 0 : index
      %c527 = arith.constant 527 : index
      %68 = vector.load %arg4[%c0_49, %c0_50, %c527] : memref<2x2x1408xf32, #tpu.memory_space<vmem>>, vector<1x2x3xf32>
      %69 = vector.shape_cast %68 : vector<1x2x3xf32> to vector<2x3xf32>
      %c0_51 = arith.constant 0 : index
      %c6 = arith.constant 6 : index
      %70 = vector.load %arg8[%c0_51, %c6] : memref<2x138xf32, #tpu.memory_space<vmem>>, vector<2x3xf32>
      tpu.vector_store %arg8[%c0_51, %c6], %69 {strides = array<i32>} : memref<2x138xf32, #tpu.memory_space<vmem>>, vector<2x3xf32>,
      %c0_52 = arith.constant 0 : index
      %c0_53 = arith.constant 0 : index
      %c905 = arith.constant 905 : index
      %71 = vector.load %arg4[%c0_52, %c0_53, %c905] : memref<2x2x1408xf32, #tpu.memory_space<vmem>>, vector<1x2x3xf32>
      %72 = vector.shape_cast %71 : vector<1x2x3xf32> to vector<2x3xf32>
      %c0_54 = arith.constant 0 : index
      %c9 = arith.constant 9 : index
      %73 = vector.load %arg8[%c0_54, %c9] : memref<2x138xf32, #tpu.memory_space<vmem>>, vector<2x3xf32>
      tpu.vector_store %arg8[%c0_54, %c9], %72 {strides = array<i32>} : memref<2x138xf32, #tpu.memory_space<vmem>>, vector<2x3xf32>,
      %c0_55 = arith.constant 0 : index
      %c0_56 = arith.constant 0 : index
      %c383 = arith.constant 383 : index
      %74 = vector.load %arg4[%c0_55, %c0_56, %c383] : memref<2x2x1408xf32, #tpu.memory_space<vmem>>, vector<1x2x3xf32>
      %75 = vector.shape_cast %74 : vector<1x2x3xf32> to vector<2x3xf32>
      %c0_57 = arith.constant 0 : index
      %c12 = arith.constant 12 : index
      %76 = vector.load %arg8[%c0_57, %c12] : memref<2x138xf32, #tpu.memory_space<vmem>>, vector<2x3xf32>
      tpu.vector_store %arg8[%c0_57, %c12], %75 {strides = array<i32>} : memref<2x138xf32, #tpu.memory_space<vmem>>, vector<2x3xf32>,
      %c0_58 = arith.constant 0 : index
      %c0_59 = arith.constant 0 : index
      %c1284 = arith.constant 1284 : index
      %77 = vector.load %arg3[%c0_58, %c0_59, %c1284] : memref<2x2x1920xf32, #tpu.memory_space<vmem>>, vector<1x2x3xf32>
      %78 = vector.shape_cast %77 : vector<1x2x3xf32> to vector<2x3xf32>
      %c0_60 = arith.constant 0 : index
      %c15 = arith.constant 15 : index
      %79 = vector.load %arg8[%c0_60, %c15] : memref<2x138xf32, #tpu.memory_space<vmem>>, vector<2x3xf32>
      tpu.vector_store %arg8[%c0_60, %c15], %78 {strides = array<i32>} : memref<2x138xf32, #tpu.memory_space<vmem>>, vector<2x3xf32>,
      %c0_61 = arith.constant 0 : index
      %c0_62 = arith.constant 0 : index
      %c537 = arith.constant 537 : index
      %80 = vector.load %arg3[%c0_61, %c0_62, %c537] : memref<2x2x1920xf32, #tpu.memory_space<vmem>>, vector<1x2x3xf32>
      %81 = vector.shape_cast %80 : vector<1x2x3xf32> to vector<2x3xf32>
      %c0_63 = arith.constant 0 : index
      %c18 = arith.constant 18 : index
      %82 = vector.load %arg8[%c0_63, %c18] : memref<2x138xf32, #tpu.memory_space<vmem>>, vector<2x3xf32>
      tpu.vector_store %arg8[%c0_63, %c18], %81 {strides = array<i32>} : memref<2x138xf32, #tpu.memory_space<vmem>>, vector<2x3xf32>,
      %c0_64 = arith.constant 0 : index
      %c0_65 = arith.constant 0 : index
      %c1322 = arith.constant 1322 : index
      %83 = vector.load %arg4[%c0_64, %c0_65, %c1322] : memref<2x2x1408xf32, #tpu.memory_space<vmem>>, vector<1x2x3xf32>
      %84 = vector.shape_cast %83 : vector<1x2x3xf32> to vector<2x3xf32>
      %c0_66 = arith.constant 0 : index
      %c21 = arith.constant 21 : index
      %85 = vector.load %arg8[%c0_66, %c21] : memref<2x138xf32, #tpu.memory_space<vmem>>, vector<2x3xf32>
      tpu.vector_store %arg8[%c0_66, %c21], %84 {strides = array<i32>} : memref<2x138xf32, #tpu.memory_space<vmem>>, vector<2x3xf32>,
      %c0_67 = arith.constant 0 : index
      %c0_68 = arith.constant 0 : index
      %c595 = arith.constant 595 : index
      %86 = vector.load %arg5[%c0_67, %c0_68, %c595] : memref<2x2x1280xf32, #tpu.memory_space<vmem>>, vector<1x2x3xf32>
      %87 = vector.shape_cast %86 : vector<1x2x3xf32> to vector<2x3xf32>
      %c0_69 = arith.constant 0 : index
      %c24 = arith.constant 24 : index
      %88 = vector.load %arg8[%c0_69, %c24] : memref<2x138xf32, #tpu.memory_space<vmem>>, vector<2x3xf32>
      tpu.vector_store %arg8[%c0_69, %c24], %87 {strides = array<i32>} : memref<2x138xf32, #tpu.memory_space<vmem>>, vector<2x3xf32>,
      %c0_70 = arith.constant 0 : index
      %c0_71 = arith.constant 0 : index
      %c952 = arith.constant 952 : index
      %89 = vector.load %arg5[%c0_70, %c0_71, %c952] : memref<2x2x1280xf32, #tpu.memory_space<vmem>>, vector<1x2x3xf32>
      %90 = vector.shape_cast %89 : vector<1x2x3xf32> to vector<2x3xf32>
      %c0_72 = arith.constant 0 : index
      %c27 = arith.constant 27 : index
      %91 = vector.load %arg8[%c0_72, %c27] : memref<2x138xf32, #tpu.memory_space<vmem>>, vector<2x3xf32>
      tpu.vector_store %arg8[%c0_72, %c27], %90 {strides = array<i32>} : memref<2x138xf32, #tpu.memory_space<vmem>>, vector<2x3xf32>,
      %c0_73 = arith.constant 0 : index
      %c0_74 = arith.constant 0 : index
      %c943 = arith.constant 943 : index
      %92 = vector.load %arg5[%c0_73, %c0_74, %c943] : memref<2x2x1280xf32, #tpu.memory_space<vmem>>, vector<1x2x3xf32>
      %93 = vector.shape_cast %92 : vector<1x2x3xf32> to vector<2x3xf32>
      %c0_75 = arith.constant 0 : index
      %c30 = arith.constant 30 : index
      %94 = vector.load %arg8[%c0_75, %c30] : memref<2x138xf32, #tpu.memory_space<vmem>>, vector<2x3xf32>
      tpu.vector_store %arg8[%c0_75, %c30], %93 {strides = array<i32>} : memref<2x138xf32, #tpu.memory_space<vmem>>, vector<2x3xf32>,
      %c0_76 = arith.constant 0 : index
      %c0_77 = arith.constant 0 : index
      %c1054 = arith.constant 1054 : index
      %95 = vector.load %arg5[%c0_76, %c0_77, %c1054] : memref<2x2x1280xf32, #tpu.memory_space<vmem>>, vector<1x2x3xf32>
      %96 = vector.shape_cast %95 : vector<1x2x3xf32> to vector<2x3xf32>
      %c0_78 = arith.constant 0 : index
      %c33 = arith.constant 33 : index
      %97 = vector.load %arg8[%c0_78, %c33] : memref<2x138xf32, #tpu.memory_space<vmem>>, vector<2x3xf32>
      tpu.vector_store %arg8[%c0_78, %c33], %96 {strides = array<i32>} : memref<2x138xf32, #tpu.memory_space<vmem>>, vector<2x3xf32>,
      %c0_79 = arith.constant 0 : index
      %c0_80 = arith.constant 0 : index
      %c57 = arith.constant 57 : index
      %98 = vector.load %arg3[%c0_79, %c0_80, %c57] : memref<2x2x1920xf32, #tpu.memory_space<vmem>>, vector<1x2x3xf32>
      %99 = vector.shape_cast %98 : vector<1x2x3xf32> to vector<2x3xf32>
      %c0_81 = arith.constant 0 : index
      %c36 = arith.constant 36 : index
      %100 = vector.load %arg8[%c0_81, %c36] : memref<2x138xf32, #tpu.memory_space<vmem>>, vector<2x3xf32>
      tpu.vector_store %arg8[%c0_81, %c36], %99 {strides = array<i32>} : memref<2x138xf32, #tpu.memory_space<vmem>>, vector<2x3xf32>,
      %c0_82 = arith.constant 0 : index
      %c0_83 = arith.constant 0 : index
      %c1240 = arith.constant 1240 : index
      %101 = vector.load %arg5[%c0_82, %c0_83, %c1240] : memref<2x2x1280xf32, #tpu.memory_space<vmem>>, vector<1x2x3xf32>
      %102 = vector.shape_cast %101 : vector<1x2x3xf32> to vector<2x3xf32>
      %c0_84 = arith.constant 0 : index
      %c39 = arith.constant 39 : index
      %103 = vector.load %arg8[%c0_84, %c39] : memref<2x138xf32, #tpu.memory_space<vmem>>, vector<2x3xf32>
      tpu.vector_store %arg8[%c0_84, %c39], %102 {strides = array<i32>} : memref<2x138xf32, #tpu.memory_space<vmem>>, vector<2x3xf32>,
      %c0_85 = arith.constant 0 : index
      %c0_86 = arith.constant 0 : index
      %c472 = arith.constant 472 : index
      %104 = vector.load %arg6[%c0_85, %c0_86, %c472] : memref<2x2x1024xf32, #tpu.memory_space<vmem>>, vector<1x2x3xf32>
      %105 = vector.shape_cast %104 : vector<1x2x3xf32> to vector<2x3xf32>
      %c0_87 = arith.constant 0 : index
      %c42 = arith.constant 42 : index
      %106 = vector.load %arg8[%c0_87, %c42] : memref<2x138xf32, #tpu.memory_space<vmem>>, vector<2x3xf32>
      tpu.vector_store %arg8[%c0_87, %c42], %105 {strides = array<i32>} : memref<2x138xf32, #tpu.memory_space<vmem>>, vector<2x3xf32>,
      %c0_88 = arith.constant 0 : index
      %c0_89 = arith.constant 0 : index
      %c916 = arith.constant 916 : index
      %107 = vector.load %arg6[%c0_88, %c0_89, %c916] : memref<2x2x1024xf32, #tpu.memory_space<vmem>>, vector<1x2x3xf32>
      %108 = vector.shape_cast %107 : vector<1x2x3xf32> to vector<2x3xf32>
      %c0_90 = arith.constant 0 : index
      %c45 = arith.constant 45 : index
      %109 = vector.load %arg8[%c0_90, %c45] : memref<2x138xf32, #tpu.memory_space<vmem>>, vector<2x3xf32>
      tpu.vector_store %arg8[%c0_90, %c45], %108 {strides = array<i32>} : memref<2x138xf32, #tpu.memory_space<vmem>>, vector<2x3xf32>,
      %c0_91 = arith.constant 0 : index
      %c0_92 = arith.constant 0 : index
      %c571 = arith.constant 571 : index
      %110 = vector.load %arg6[%c0_91, %c0_92, %c571] : memref<2x2x1024xf32, #tpu.memory_space<vmem>>, vector<1x2x3xf32>
      %111 = vector.shape_cast %110 : vector<1x2x3xf32> to vector<2x3xf32>
      %c0_93 = arith.constant 0 : index
      %c48 = arith.constant 48 : index
      %112 = vector.load %arg8[%c0_93, %c48] : memref<2x138xf32, #tpu.memory_space<vmem>>, vector<2x3xf32>
      tpu.vector_store %arg8[%c0_93, %c48], %111 {strides = array<i32>} : memref<2x138xf32, #tpu.memory_space<vmem>>, vector<2x3xf32>,
      %c0_94 = arith.constant 0 : index
      %c0_95 = arith.constant 0 : index
      %c604 = arith.constant 604 : index
      %113 = vector.load %arg6[%c0_94, %c0_95, %c604] : memref<2x2x1024xf32, #tpu.memory_space<vmem>>, vector<1x2x3xf32>
      %114 = vector.shape_cast %113 : vector<1x2x3xf32> to vector<2x3xf32>
      %c0_96 = arith.constant 0 : index
      %c51 = arith.constant 51 : index
      %115 = vector.load %arg8[%c0_96, %c51] : memref<2x138xf32, #tpu.memory_space<vmem>>, vector<2x3xf32>
      tpu.vector_store %arg8[%c0_96, %c51], %114 {strides = array<i32>} : memref<2x138xf32, #tpu.memory_space<vmem>>, vector<2x3xf32>,
      %c0_97 = arith.constant 0 : index
      %c0_98 = arith.constant 0 : index
      %c1092 = arith.constant 1092 : index
      %116 = vector.load %arg3[%c0_97, %c0_98, %c1092] : memref<2x2x1920xf32, #tpu.memory_space<vmem>>, vector<1x2x3xf32>
      %117 = vector.shape_cast %116 : vector<1x2x3xf32> to vector<2x3xf32>
      %c0_99 = arith.constant 0 : index
      %c54 = arith.constant 54 : index
      %118 = vector.load %arg8[%c0_99, %c54] : memref<2x138xf32, #tpu.memory_space<vmem>>, vector<2x3xf32>
      tpu.vector_store %arg8[%c0_99, %c54], %117 {strides = array<i32>} : memref<2x138xf32, #tpu.memory_space<vmem>>, vector<2x3xf32>,
      %c0_100 = arith.constant 0 : index
      %c0_101 = arith.constant 0 : index
      %c1878 = arith.constant 1878 : index
      %119 = vector.load %arg3[%c0_100, %c0_101, %c1878] : memref<2x2x1920xf32, #tpu.memory_space<vmem>>, vector<1x2x3xf32>
      %120 = vector.shape_cast %119 : vector<1x2x3xf32> to vector<2x3xf32>
      %c0_102 = arith.constant 0 : index
      %c57_103 = arith.constant 57 : index
      %121 = vector.load %arg8[%c0_102, %c57_103] : memref<2x138xf32, #tpu.memory_space<vmem>>, vector<2x3xf32>
      tpu.vector_store %arg8[%c0_102, %c57_103], %120 {strides = array<i32>} : memref<2x138xf32, #tpu.memory_space<vmem>>, vector<2x3xf32>,
      %c0_104 = arith.constant 0 : index
      %c0_105 = arith.constant 0 : index
      %c122 = arith.constant 122 : index
      %122 = vector.load %arg7[%c0_104, %c0_105, %c122] : memref<2x2x1536xf32, #tpu.memory_space<vmem>>, vector<1x2x3xf32>
      %123 = vector.shape_cast %122 : vector<1x2x3xf32> to vector<2x3xf32>
      %c0_106 = arith.constant 0 : index
      %c60 = arith.constant 60 : index
      %124 = vector.load %arg8[%c0_106, %c60] : memref<2x138xf32, #tpu.memory_space<vmem>>, vector<2x3xf32>
      tpu.vector_store %arg8[%c0_106, %c60], %123 {strides = array<i32>} : memref<2x138xf32, #tpu.memory_space<vmem>>, vector<2x3xf32>,
      %c0_107 = arith.constant 0 : index
      %c0_108 = arith.constant 0 : index
      %c1028 = arith.constant 1028 : index
      %125 = vector.load %arg7[%c0_107, %c0_108, %c1028] : memref<2x2x1536xf32, #tpu.memory_space<vmem>>, vector<1x2x3xf32>
      %126 = vector.shape_cast %125 : vector<1x2x3xf32> to vector<2x3xf32>
      %c0_109 = arith.constant 0 : index
      %c63 = arith.constant 63 : index
      %127 = vector.load %arg8[%c0_109, %c63] : memref<2x138xf32, #tpu.memory_space<vmem>>, vector<2x3xf32>
      tpu.vector_store %arg8[%c0_109, %c63], %126 {strides = array<i32>} : memref<2x138xf32, #tpu.memory_space<vmem>>, vector<2x3xf32>,
      %c0_110 = arith.constant 0 : index
      %c0_111 = arith.constant 0 : index
      %c1349 = arith.constant 1349 : index
      %128 = vector.load %arg7[%c0_110, %c0_111, %c1349] : memref<2x2x1536xf32, #tpu.memory_space<vmem>>, vector<1x2x3xf32>
      %129 = vector.shape_cast %128 : vector<1x2x3xf32> to vector<2x3xf32>
      %c0_112 = arith.constant 0 : index
      %c66 = arith.constant 66 : index
      %130 = vector.load %arg8[%c0_112, %c66] : memref<2x138xf32, #tpu.memory_space<vmem>>, vector<2x3xf32>
      tpu.vector_store %arg8[%c0_112, %c66], %129 {strides = array<i32>} : memref<2x138xf32, #tpu.memory_space<vmem>>, vector<2x3xf32>,
      %c0_113 = arith.constant 0 : index
      %c0_114 = arith.constant 0 : index
      %c1292 = arith.constant 1292 : index
      %131 = vector.load %arg7[%c0_113, %c0_114, %c1292] : memref<2x2x1536xf32, #tpu.memory_space<vmem>>, vector<1x2x3xf32>
      %132 = vector.shape_cast %131 : vector<1x2x3xf32> to vector<2x3xf32>
      %c0_115 = arith.constant 0 : index
      %c69 = arith.constant 69 : index
      %133 = vector.load %arg8[%c0_115, %c69] : memref<2x138xf32, #tpu.memory_space<vmem>>, vector<2x3xf32>
      tpu.vector_store %arg8[%c0_115, %c69], %132 {strides = array<i32>} : memref<2x138xf32, #tpu.memory_space<vmem>>, vector<2x3xf32>,
      %c0_116 = arith.constant 0 : index
      %c0_117 = arith.constant 0 : index
      %c1505 = arith.constant 1505 : index
      %134 = vector.load %arg7[%c0_116, %c0_117, %c1505] : memref<2x2x1536xf32, #tpu.memory_space<vmem>>, vector<1x2x3xf32>
      %135 = vector.shape_cast %134 : vector<1x2x3xf32> to vector<2x3xf32>
      %c0_118 = arith.constant 0 : index
      %c72 = arith.constant 72 : index
      %136 = vector.load %arg8[%c0_118, %c72] : memref<2x138xf32, #tpu.memory_space<vmem>>, vector<2x3xf32>
      tpu.vector_store %arg8[%c0_118, %c72], %135 {strides = array<i32>} : memref<2x138xf32, #tpu.memory_space<vmem>>, vector<2x3xf32>,
      %c0_119 = arith.constant 0 : index
      %c0_120 = arith.constant 0 : index
      %c0_121 = arith.constant 0 : index
      %137 = vector.load %arg3[%c0_119, %c0_120, %c0_121] : memref<2x2x1920xf32, #tpu.memory_space<vmem>>, vector<1x2x3xf32>
      %138 = vector.shape_cast %137 : vector<1x2x3xf32> to vector<2x3xf32>
      %c0_122 = arith.constant 0 : index
      %c75 = arith.constant 75 : index
      %139 = vector.load %arg8[%c0_122, %c75] : memref<2x138xf32, #tpu.memory_space<vmem>>, vector<2x3xf32>
      tpu.vector_store %arg8[%c0_122, %c75], %138 {strides = array<i32>} : memref<2x138xf32, #tpu.memory_space<vmem>>, vector<2x3xf32>,
      %c0_123 = arith.constant 0 : index
      %c78 = arith.constant 78 : index
      %140 = vector.load %arg8[%c0_123, %c78] : memref<2x138xf32, #tpu.memory_space<vmem>>, vector<2x3xf32>
      tpu.vector_store %arg8[%c0_123, %c78], %138 {strides = array<i32>} : memref<2x138xf32, #tpu.memory_space<vmem>>, vector<2x3xf32>,
      %c0_124 = arith.constant 0 : index
      %c81 = arith.constant 81 : index
      %141 = vector.load %arg8[%c0_124, %c81] : memref<2x138xf32, #tpu.memory_space<vmem>>, vector<2x3xf32>
      tpu.vector_store %arg8[%c0_124, %c81], %138 {strides = array<i32>} : memref<2x138xf32, #tpu.memory_space<vmem>>, vector<2x3xf32>,
      %c0_125 = arith.constant 0 : index
      %c84 = arith.constant 84 : index
      %142 = vector.load %arg8[%c0_125, %c84] : memref<2x138xf32, #tpu.memory_space<vmem>>, vector<2x3xf32>
      tpu.vector_store %arg8[%c0_125, %c84], %138 {strides = array<i32>} : memref<2x138xf32, #tpu.memory_space<vmem>>, vector<2x3xf32>,
      %c0_126 = arith.constant 0 : index
      %c87 = arith.constant 87 : index
      %143 = vector.load %arg8[%c0_126, %c87] : memref<2x138xf32, #tpu.memory_space<vmem>>, vector<2x3xf32>
      tpu.vector_store %arg8[%c0_126, %c87], %138 {strides = array<i32>} : memref<2x138xf32, #tpu.memory_space<vmem>>, vector<2x3xf32>,
      %c0_127 = arith.constant 0 : index
      %c90 = arith.constant 90 : index
      %144 = vector.load %arg8[%c0_127, %c90] : memref<2x138xf32, #tpu.memory_space<vmem>>, vector<2x3xf32>
      tpu.vector_store %arg8[%c0_127, %c90], %138 {strides = array<i32>} : memref<2x138xf32, #tpu.memory_space<vmem>>, vector<2x3xf32>,
      %c0_128 = arith.constant 0 : index
      %c93 = arith.constant 93 : index
      %145 = vector.load %arg8[%c0_128, %c93] : memref<2x138xf32, #tpu.memory_space<vmem>>, vector<2x3xf32>
      tpu.vector_store %arg8[%c0_128, %c93], %138 {strides = array<i32>} : memref<2x138xf32, #tpu.memory_space<vmem>>, vector<2x3xf32>,
      %c0_129 = arith.constant 0 : index
      %c132 = arith.constant 132 : index
      %146 = vector.load %arg8[%c0_129, %c132] : memref<2x138xf32, #tpu.memory_space<vmem>>, vector<2x3xf32>
      tpu.vector_store %arg8[%c0_129, %c132], %138 {strides = array<i32>} : memref<2x138xf32, #tpu.memory_space<vmem>>, vector<2x3xf32>,
      %c0_130 = arith.constant 0 : index
      %c135 = arith.constant 135 : index
      %147 = vector.load %arg8[%c0_130, %c135] : memref<2x138xf32, #tpu.memory_space<vmem>>, vector<2x3xf32>
      tpu.vector_store %arg8[%c0_130, %c135], %138 {strides = array<i32>} : memref<2x138xf32, #tpu.memory_space<vmem>>, vector<2x3xf32>,
      %c0_131 = arith.constant 0 : index
      %c0_132 = arith.constant 0 : index
      %c988 = arith.constant 988 : index
      %148 = vector.load %arg5[%c0_131, %c0_132, %c988] : memref<2x2x1280xf32, #tpu.memory_space<vmem>>, vector<1x2x3xf32>
      %149 = vector.shape_cast %148 : vector<1x2x3xf32> to vector<2x3xf32>
      %c0_133 = arith.constant 0 : index
      %c96 = arith.constant 96 : index
      %150 = vector.load %arg8[%c0_133, %c96] : memref<2x138xf32, #tpu.memory_space<vmem>>, vector<2x3xf32>
      tpu.vector_store %arg8[%c0_133, %c96], %149 {strides = array<i32>} : memref<2x138xf32, #tpu.memory_space<vmem>>, vector<2x3xf32>,
      %c0_134 = arith.constant 0 : index
      %c0_135 = arith.constant 0 : index
      %c724 = arith.constant 724 : index
      %151 = vector.load %arg5[%c0_134, %c0_135, %c724] : memref<2x2x1280xf32, #tpu.memory_space<vmem>>, vector<1x2x3xf32>
      %152 = vector.shape_cast %151 : vector<1x2x3xf32> to vector<2x3xf32>
      %c0_136 = arith.constant 0 : index
      %c99 = arith.constant 99 : index
      %153 = vector.load %arg8[%c0_136, %c99] : memref<2x138xf32, #tpu.memory_space<vmem>>, vector<2x3xf32>
      tpu.vector_store %arg8[%c0_136, %c99], %152 {strides = array<i32>} : memref<2x138xf32, #tpu.memory_space<vmem>>, vector<2x3xf32>,
      %c0_137 = arith.constant 0 : index
      %c0_138 = arith.constant 0 : index
      %c121 = arith.constant 121 : index
      %154 = vector.load %arg5[%c0_137, %c0_138, %c121] : memref<2x2x1280xf32, #tpu.memory_space<vmem>>, vector<1x2x3xf32>
      %155 = vector.shape_cast %154 : vector<1x2x3xf32> to vector<2x3xf32>
      %c0_139 = arith.constant 0 : index
      %c102 = arith.constant 102 : index
      %156 = vector.load %arg8[%c0_139, %c102] : memref<2x138xf32, #tpu.memory_space<vmem>>, vector<2x3xf32>
      tpu.vector_store %arg8[%c0_139, %c102], %155 {strides = array<i32>} : memref<2x138xf32, #tpu.memory_space<vmem>>, vector<2x3xf32>,
      %c0_140 = arith.constant 0 : index
      %c0_141 = arith.constant 0 : index
      %c451 = arith.constant 451 : index
      %157 = vector.load %arg5[%c0_140, %c0_141, %c451] : memref<2x2x1280xf32, #tpu.memory_space<vmem>>, vector<1x2x3xf32>
      %158 = vector.shape_cast %157 : vector<1x2x3xf32> to vector<2x3xf32>
      %c0_142 = arith.constant 0 : index
      %c105 = arith.constant 105 : index
      %159 = vector.load %arg8[%c0_142, %c105] : memref<2x138xf32, #tpu.memory_space<vmem>>, vector<2x3xf32>
      tpu.vector_store %arg8[%c0_142, %c105], %158 {strides = array<i32>} : memref<2x138xf32, #tpu.memory_space<vmem>>, vector<2x3xf32>,
      %c0_143 = arith.constant 0 : index
      %c0_144 = arith.constant 0 : index
      %c811 = arith.constant 811 : index
      %160 = vector.load %arg6[%c0_143, %c0_144, %c811] : memref<2x2x1024xf32, #tpu.memory_space<vmem>>, vector<1x2x3xf32>
      %161 = vector.shape_cast %160 : vector<1x2x3xf32> to vector<2x3xf32>
      %c0_145 = arith.constant 0 : index
      %c108 = arith.constant 108 : index
      %162 = vector.load %arg8[%c0_145, %c108] : memref<2x138xf32, #tpu.memory_space<vmem>>, vector<2x3xf32>
      tpu.vector_store %arg8[%c0_145, %c108], %161 {strides = array<i32>} : memref<2x138xf32, #tpu.memory_space<vmem>>, vector<2x3xf32>,
      %c0_146 = arith.constant 0 : index
      %c0_147 = arith.constant 0 : index
      %c823 = arith.constant 823 : index
      %163 = vector.load %arg6[%c0_146, %c0_147, %c823] : memref<2x2x1024xf32, #tpu.memory_space<vmem>>, vector<1x2x3xf32>
      %164 = vector.shape_cast %163 : vector<1x2x3xf32> to vector<2x3xf32>
      %c0_148 = arith.constant 0 : index
      %c111 = arith.constant 111 : index
      %165 = vector.load %arg8[%c0_148, %c111] : memref<2x138xf32, #tpu.memory_space<vmem>>, vector<2x3xf32>
      tpu.vector_store %arg8[%c0_148, %c111], %164 {strides = array<i32>} : memref<2x138xf32, #tpu.memory_space<vmem>>, vector<2x3xf32>,
      %c0_149 = arith.constant 0 : index
      %c0_150 = arith.constant 0 : index
      %c109 = arith.constant 109 : index
      %166 = vector.load %arg6[%c0_149, %c0_150, %c109] : memref<2x2x1024xf32, #tpu.memory_space<vmem>>, vector<1x2x3xf32>
      %167 = vector.shape_cast %166 : vector<1x2x3xf32> to vector<2x3xf32>
      %c0_151 = arith.constant 0 : index
      %c114 = arith.constant 114 : index
      %168 = vector.load %arg8[%c0_151, %c114] : memref<2x138xf32, #tpu.memory_space<vmem>>, vector<2x3xf32>
      tpu.vector_store %arg8[%c0_151, %c114], %167 {strides = array<i32>} : memref<2x138xf32, #tpu.memory_space<vmem>>, vector<2x3xf32>,
      %c0_152 = arith.constant 0 : index
      %c0_153 = arith.constant 0 : index
      %c439 = arith.constant 439 : index
      %169 = vector.load %arg6[%c0_152, %c0_153, %c439] : memref<2x2x1024xf32, #tpu.memory_space<vmem>>, vector<1x2x3xf32>
      %170 = vector.shape_cast %169 : vector<1x2x3xf32> to vector<2x3xf32>
      %c0_154 = arith.constant 0 : index
      %c117 = arith.constant 117 : index
      %171 = vector.load %arg8[%c0_154, %c117] : memref<2x138xf32, #tpu.memory_space<vmem>>, vector<2x3xf32>
      tpu.vector_store %arg8[%c0_154, %c117], %170 {strides = array<i32>} : memref<2x138xf32, #tpu.memory_space<vmem>>, vector<2x3xf32>,
      %c0_155 = arith.constant 0 : index
      %c0_156 = arith.constant 0 : index
      %c1205 = arith.constant 1205 : index
      %172 = vector.load %arg7[%c0_155, %c0_156, %c1205] : memref<2x2x1536xf32, #tpu.memory_space<vmem>>, vector<1x2x3xf32>
      %173 = vector.shape_cast %172 : vector<1x2x3xf32> to vector<2x3xf32>
      %c0_157 = arith.constant 0 : index
      %c120 = arith.constant 120 : index
      %174 = vector.load %arg8[%c0_157, %c120] : memref<2x138xf32, #tpu.memory_space<vmem>>, vector<2x3xf32>
      tpu.vector_store %arg8[%c0_157, %c120], %173 {strides = array<i32>} : memref<2x138xf32, #tpu.memory_space<vmem>>, vector<2x3xf32>,
      %c0_158 = arith.constant 0 : index
      %c0_159 = arith.constant 0 : index
      %c1094 = arith.constant 1094 : index
      %175 = vector.load %arg7[%c0_158, %c0_159, %c1094] : memref<2x2x1536xf32, #tpu.memory_space<vmem>>, vector<1x2x3xf32>
      %176 = vector.shape_cast %175 : vector<1x2x3xf32> to vector<2x3xf32>
      %c0_160 = arith.constant 0 : index
      %c123 = arith.constant 123 : index
      %177 = vector.load %arg8[%c0_160, %c123] : memref<2x138xf32, #tpu.memory_space<vmem>>, vector<2x3xf32>
      tpu.vector_store %arg8[%c0_160, %c123], %176 {strides = array<i32>} : memref<2x138xf32, #tpu.memory_space<vmem>>, vector<2x3xf32>,
      %c0_161 = arith.constant 0 : index
      %c0_162 = arith.constant 0 : index
      %c692 = arith.constant 692 : index
      %178 = vector.load %arg7[%c0_161, %c0_162, %c692] : memref<2x2x1536xf32, #tpu.memory_space<vmem>>, vector<1x2x3xf32>
      %179 = vector.shape_cast %178 : vector<1x2x3xf32> to vector<2x3xf32>
      %c0_163 = arith.constant 0 : index
      %c126 = arith.constant 126 : index
      %180 = vector.load %arg8[%c0_163, %c126] : memref<2x138xf32, #tpu.memory_space<vmem>>, vector<2x3xf32>
      tpu.vector_store %arg8[%c0_163, %c126], %179 {strides = array<i32>} : memref<2x138xf32, #tpu.memory_space<vmem>>, vector<2x3xf32>,
      %c0_164 = arith.constant 0 : index
      %c0_165 = arith.constant 0 : index
      %c899 = arith.constant 899 : index
      %181 = vector.load %arg7[%c0_164, %c0_165, %c899] : memref<2x2x1536xf32, #tpu.memory_space<vmem>>, vector<1x2x3xf32>
      %182 = vector.shape_cast %181 : vector<1x2x3xf32> to vector<2x3xf32>
      %c0_166 = arith.constant 0 : index
      %c129 = arith.constant 129 : index
      %183 = vector.load %arg8[%c0_166, %c129] : memref<2x138xf32, #tpu.memory_space<vmem>>, vector<2x3xf32>
      tpu.vector_store %arg8[%c0_166, %c129], %182 {strides = array<i32>} : memref<2x138xf32, #tpu.memory_space<vmem>>, vector<2x3xf32>,
    } else {
    }
    %c1_i32_36 = arith.constant 1 : i32
    %53 = arith.cmpi eq, %9, %c1_i32_36 : i32
    %54 = arith.extui %53 : i1 to i32
    %c0_i32_37 = arith.constant 0 : i32
    %55 = arith.cmpi ne, %54, %c0_i32_37 : i32
    scf.if %55 {
      %c1 = arith.constant 1 : index
      %c0 = arith.constant 0 : index
      %c50 = arith.constant 50 : index
      %62 = vector.load %arg4[%c1, %c0, %c50] : memref<2x2x1408xf32, #tpu.memory_space<vmem>>, vector<1x2x3xf32>
      %63 = vector.shape_cast %62 : vector<1x2x3xf32> to vector<2x3xf32>
      %c0_43 = arith.constant 0 : index
      %c0_44 = arith.constant 0 : index
      %64 = vector.load %arg8[%c0_43, %c0_44] : memref<2x138xf32, #tpu.memory_space<vmem>>, vector<2x3xf32>
      tpu.vector_store %arg8[%c0_43, %c0_44], %63 {strides = array<i32>} : memref<2x138xf32, #tpu.memory_space<vmem>>, vector<2x3xf32>,
      %c1_45 = arith.constant 1 : index
      %c0_46 = arith.constant 0 : index
      %c470 = arith.constant 470 : index
      %65 = vector.load %arg4[%c1_45, %c0_46, %c470] : memref<2x2x1408xf32, #tpu.memory_space<vmem>>, vector<1x2x3xf32>
      %66 = vector.shape_cast %65 : vector<1x2x3xf32> to vector<2x3xf32>
      %c0_47 = arith.constant 0 : index
      %c3 = arith.constant 3 : index
      %67 = vector.load %arg8[%c0_47, %c3] : memref<2x138xf32, #tpu.memory_space<vmem>>, vector<2x3xf32>
      tpu.vector_store %arg8[%c0_47, %c3], %66 {strides = array<i32>} : memref<2x138xf32, #tpu.memory_space<vmem>>, vector<2x3xf32>,
      %c1_48 = arith.constant 1 : index
      %c0_49 = arith.constant 0 : index
      %c527 = arith.constant 527 : index
      %68 = vector.load %arg4[%c1_48, %c0_49, %c527] : memref<2x2x1408xf32, #tpu.memory_space<vmem>>, vector<1x2x3xf32>
      %69 = vector.shape_cast %68 : vector<1x2x3xf32> to vector<2x3xf32>
      %c0_50 = arith.constant 0 : index
      %c6 = arith.constant 6 : index
      %70 = vector.load %arg8[%c0_50, %c6] : memref<2x138xf32, #tpu.memory_space<vmem>>, vector<2x3xf32>
      tpu.vector_store %arg8[%c0_50, %c6], %69 {strides = array<i32>} : memref<2x138xf32, #tpu.memory_space<vmem>>, vector<2x3xf32>,
      %c1_51 = arith.constant 1 : index
      %c0_52 = arith.constant 0 : index
      %c905 = arith.constant 905 : index
      %71 = vector.load %arg4[%c1_51, %c0_52, %c905] : memref<2x2x1408xf32, #tpu.memory_space<vmem>>, vector<1x2x3xf32>
      %72 = vector.shape_cast %71 : vector<1x2x3xf32> to vector<2x3xf32>
      %c0_53 = arith.constant 0 : index
      %c9 = arith.constant 9 : index
      %73 = vector.load %arg8[%c0_53, %c9] : memref<2x138xf32, #tpu.memory_space<vmem>>, vector<2x3xf32>
      tpu.vector_store %arg8[%c0_53, %c9], %72 {strides = array<i32>} : memref<2x138xf32, #tpu.memory_space<vmem>>, vector<2x3xf32>,
      %c1_54 = arith.constant 1 : index
      %c0_55 = arith.constant 0 : index
      %c383 = arith.constant 383 : index
      %74 = vector.load %arg4[%c1_54, %c0_55, %c383] : memref<2x2x1408xf32, #tpu.memory_space<vmem>>, vector<1x2x3xf32>
      %75 = vector.shape_cast %74 : vector<1x2x3xf32> to vector<2x3xf32>
      %c0_56 = arith.constant 0 : index
      %c12 = arith.constant 12 : index
      %76 = vector.load %arg8[%c0_56, %c12] : memref<2x138xf32, #tpu.memory_space<vmem>>, vector<2x3xf32>
      tpu.vector_store %arg8[%c0_56, %c12], %75 {strides = array<i32>} : memref<2x138xf32, #tpu.memory_space<vmem>>, vector<2x3xf32>,
      %c1_57 = arith.constant 1 : index
      %c0_58 = arith.constant 0 : index
      %c1284 = arith.constant 1284 : index
      %77 = vector.load %arg3[%c1_57, %c0_58, %c1284] : memref<2x2x1920xf32, #tpu.memory_space<vmem>>, vector<1x2x3xf32>
      %78 = vector.shape_cast %77 : vector<1x2x3xf32> to vector<2x3xf32>
      %c0_59 = arith.constant 0 : index
      %c15 = arith.constant 15 : index
      %79 = vector.load %arg8[%c0_59, %c15] : memref<2x138xf32, #tpu.memory_space<vmem>>, vector<2x3xf32>
      tpu.vector_store %arg8[%c0_59, %c15], %78 {strides = array<i32>} : memref<2x138xf32, #tpu.memory_space<vmem>>, vector<2x3xf32>,
      %c1_60 = arith.constant 1 : index
      %c0_61 = arith.constant 0 : index
      %c537 = arith.constant 537 : index
      %80 = vector.load %arg3[%c1_60, %c0_61, %c537] : memref<2x2x1920xf32, #tpu.memory_space<vmem>>, vector<1x2x3xf32>
      %81 = vector.shape_cast %80 : vector<1x2x3xf32> to vector<2x3xf32>
      %c0_62 = arith.constant 0 : index
      %c18 = arith.constant 18 : index
      %82 = vector.load %arg8[%c0_62, %c18] : memref<2x138xf32, #tpu.memory_space<vmem>>, vector<2x3xf32>
      tpu.vector_store %arg8[%c0_62, %c18], %81 {strides = array<i32>} : memref<2x138xf32, #tpu.memory_space<vmem>>, vector<2x3xf32>,
      %c1_63 = arith.constant 1 : index
      %c0_64 = arith.constant 0 : index
      %c1322 = arith.constant 1322 : index
      %83 = vector.load %arg4[%c1_63, %c0_64, %c1322] : memref<2x2x1408xf32, #tpu.memory_space<vmem>>, vector<1x2x3xf32>
      %84 = vector.shape_cast %83 : vector<1x2x3xf32> to vector<2x3xf32>
      %c0_65 = arith.constant 0 : index
      %c21 = arith.constant 21 : index
      %85 = vector.load %arg8[%c0_65, %c21] : memref<2x138xf32, #tpu.memory_space<vmem>>, vector<2x3xf32>
      tpu.vector_store %arg8[%c0_65, %c21], %84 {strides = array<i32>} : memref<2x138xf32, #tpu.memory_space<vmem>>, vector<2x3xf32>,
      %c1_66 = arith.constant 1 : index
      %c0_67 = arith.constant 0 : index
      %c595 = arith.constant 595 : index
      %86 = vector.load %arg5[%c1_66, %c0_67, %c595] : memref<2x2x1280xf32, #tpu.memory_space<vmem>>, vector<1x2x3xf32>
      %87 = vector.shape_cast %86 : vector<1x2x3xf32> to vector<2x3xf32>
      %c0_68 = arith.constant 0 : index
      %c24 = arith.constant 24 : index
      %88 = vector.load %arg8[%c0_68, %c24] : memref<2x138xf32, #tpu.memory_space<vmem>>, vector<2x3xf32>
      tpu.vector_store %arg8[%c0_68, %c24], %87 {strides = array<i32>} : memref<2x138xf32, #tpu.memory_space<vmem>>, vector<2x3xf32>,
      %c1_69 = arith.constant 1 : index
      %c0_70 = arith.constant 0 : index
      %c952 = arith.constant 952 : index
      %89 = vector.load %arg5[%c1_69, %c0_70, %c952] : memref<2x2x1280xf32, #tpu.memory_space<vmem>>, vector<1x2x3xf32>
      %90 = vector.shape_cast %89 : vector<1x2x3xf32> to vector<2x3xf32>
      %c0_71 = arith.constant 0 : index
      %c27 = arith.constant 27 : index
      %91 = vector.load %arg8[%c0_71, %c27] : memref<2x138xf32, #tpu.memory_space<vmem>>, vector<2x3xf32>
      tpu.vector_store %arg8[%c0_71, %c27], %90 {strides = array<i32>} : memref<2x138xf32, #tpu.memory_space<vmem>>, vector<2x3xf32>,
      %c1_72 = arith.constant 1 : index
      %c0_73 = arith.constant 0 : index
      %c943 = arith.constant 943 : index
      %92 = vector.load %arg5[%c1_72, %c0_73, %c943] : memref<2x2x1280xf32, #tpu.memory_space<vmem>>, vector<1x2x3xf32>
      %93 = vector.shape_cast %92 : vector<1x2x3xf32> to vector<2x3xf32>
      %c0_74 = arith.constant 0 : index
      %c30 = arith.constant 30 : index
      %94 = vector.load %arg8[%c0_74, %c30] : memref<2x138xf32, #tpu.memory_space<vmem>>, vector<2x3xf32>
      tpu.vector_store %arg8[%c0_74, %c30], %93 {strides = array<i32>} : memref<2x138xf32, #tpu.memory_space<vmem>>, vector<2x3xf32>,
      %c1_75 = arith.constant 1 : index
      %c0_76 = arith.constant 0 : index
      %c1054 = arith.constant 1054 : index
      %95 = vector.load %arg5[%c1_75, %c0_76, %c1054] : memref<2x2x1280xf32, #tpu.memory_space<vmem>>, vector<1x2x3xf32>
      %96 = vector.shape_cast %95 : vector<1x2x3xf32> to vector<2x3xf32>
      %c0_77 = arith.constant 0 : index
      %c33 = arith.constant 33 : index
      %97 = vector.load %arg8[%c0_77, %c33] : memref<2x138xf32, #tpu.memory_space<vmem>>, vector<2x3xf32>
      tpu.vector_store %arg8[%c0_77, %c33], %96 {strides = array<i32>} : memref<2x138xf32, #tpu.memory_space<vmem>>, vector<2x3xf32>,
      %c1_78 = arith.constant 1 : index
      %c0_79 = arith.constant 0 : index
      %c57 = arith.constant 57 : index
      %98 = vector.load %arg3[%c1_78, %c0_79, %c57] : memref<2x2x1920xf32, #tpu.memory_space<vmem>>, vector<1x2x3xf32>
      %99 = vector.shape_cast %98 : vector<1x2x3xf32> to vector<2x3xf32>
      %c0_80 = arith.constant 0 : index
      %c36 = arith.constant 36 : index
      %100 = vector.load %arg8[%c0_80, %c36] : memref<2x138xf32, #tpu.memory_space<vmem>>, vector<2x3xf32>
      tpu.vector_store %arg8[%c0_80, %c36], %99 {strides = array<i32>} : memref<2x138xf32, #tpu.memory_space<vmem>>, vector<2x3xf32>,
      %c1_81 = arith.constant 1 : index
      %c0_82 = arith.constant 0 : index
      %c1240 = arith.constant 1240 : index
      %101 = vector.load %arg5[%c1_81, %c0_82, %c1240] : memref<2x2x1280xf32, #tpu.memory_space<vmem>>, vector<1x2x3xf32>
      %102 = vector.shape_cast %101 : vector<1x2x3xf32> to vector<2x3xf32>
      %c0_83 = arith.constant 0 : index
      %c39 = arith.constant 39 : index
      %103 = vector.load %arg8[%c0_83, %c39] : memref<2x138xf32, #tpu.memory_space<vmem>>, vector<2x3xf32>
      tpu.vector_store %arg8[%c0_83, %c39], %102 {strides = array<i32>} : memref<2x138xf32, #tpu.memory_space<vmem>>, vector<2x3xf32>,
      %c1_84 = arith.constant 1 : index
      %c0_85 = arith.constant 0 : index
      %c472 = arith.constant 472 : index
      %104 = vector.load %arg6[%c1_84, %c0_85, %c472] : memref<2x2x1024xf32, #tpu.memory_space<vmem>>, vector<1x2x3xf32>
      %105 = vector.shape_cast %104 : vector<1x2x3xf32> to vector<2x3xf32>
      %c0_86 = arith.constant 0 : index
      %c42 = arith.constant 42 : index
      %106 = vector.load %arg8[%c0_86, %c42] : memref<2x138xf32, #tpu.memory_space<vmem>>, vector<2x3xf32>
      tpu.vector_store %arg8[%c0_86, %c42], %105 {strides = array<i32>} : memref<2x138xf32, #tpu.memory_space<vmem>>, vector<2x3xf32>,
      %c1_87 = arith.constant 1 : index
      %c0_88 = arith.constant 0 : index
      %c916 = arith.constant 916 : index
      %107 = vector.load %arg6[%c1_87, %c0_88, %c916] : memref<2x2x1024xf32, #tpu.memory_space<vmem>>, vector<1x2x3xf32>
      %108 = vector.shape_cast %107 : vector<1x2x3xf32> to vector<2x3xf32>
      %c0_89 = arith.constant 0 : index
      %c45 = arith.constant 45 : index
      %109 = vector.load %arg8[%c0_89, %c45] : memref<2x138xf32, #tpu.memory_space<vmem>>, vector<2x3xf32>
      tpu.vector_store %arg8[%c0_89, %c45], %108 {strides = array<i32>} : memref<2x138xf32, #tpu.memory_space<vmem>>, vector<2x3xf32>,
      %c1_90 = arith.constant 1 : index
      %c0_91 = arith.constant 0 : index
      %c571 = arith.constant 571 : index
      %110 = vector.load %arg6[%c1_90, %c0_91, %c571] : memref<2x2x1024xf32, #tpu.memory_space<vmem>>, vector<1x2x3xf32>
      %111 = vector.shape_cast %110 : vector<1x2x3xf32> to vector<2x3xf32>
      %c0_92 = arith.constant 0 : index
      %c48 = arith.constant 48 : index
      %112 = vector.load %arg8[%c0_92, %c48] : memref<2x138xf32, #tpu.memory_space<vmem>>, vector<2x3xf32>
      tpu.vector_store %arg8[%c0_92, %c48], %111 {strides = array<i32>} : memref<2x138xf32, #tpu.memory_space<vmem>>, vector<2x3xf32>,
      %c1_93 = arith.constant 1 : index
      %c0_94 = arith.constant 0 : index
      %c604 = arith.constant 604 : index
      %113 = vector.load %arg6[%c1_93, %c0_94, %c604] : memref<2x2x1024xf32, #tpu.memory_space<vmem>>, vector<1x2x3xf32>
      %114 = vector.shape_cast %113 : vector<1x2x3xf32> to vector<2x3xf32>
      %c0_95 = arith.constant 0 : index
      %c51 = arith.constant 51 : index
      %115 = vector.load %arg8[%c0_95, %c51] : memref<2x138xf32, #tpu.memory_space<vmem>>, vector<2x3xf32>
      tpu.vector_store %arg8[%c0_95, %c51], %114 {strides = array<i32>} : memref<2x138xf32, #tpu.memory_space<vmem>>, vector<2x3xf32>,
      %c1_96 = arith.constant 1 : index
      %c0_97 = arith.constant 0 : index
      %c1092 = arith.constant 1092 : index
      %116 = vector.load %arg3[%c1_96, %c0_97, %c1092] : memref<2x2x1920xf32, #tpu.memory_space<vmem>>, vector<1x2x3xf32>
      %117 = vector.shape_cast %116 : vector<1x2x3xf32> to vector<2x3xf32>
      %c0_98 = arith.constant 0 : index
      %c54 = arith.constant 54 : index
      %118 = vector.load %arg8[%c0_98, %c54] : memref<2x138xf32, #tpu.memory_space<vmem>>, vector<2x3xf32>
      tpu.vector_store %arg8[%c0_98, %c54], %117 {strides = array<i32>} : memref<2x138xf32, #tpu.memory_space<vmem>>, vector<2x3xf32>,
      %c1_99 = arith.constant 1 : index
      %c0_100 = arith.constant 0 : index
      %c1878 = arith.constant 1878 : index
      %119 = vector.load %arg3[%c1_99, %c0_100, %c1878] : memref<2x2x1920xf32, #tpu.memory_space<vmem>>, vector<1x2x3xf32>
      %120 = vector.shape_cast %119 : vector<1x2x3xf32> to vector<2x3xf32>
      %c0_101 = arith.constant 0 : index
      %c57_102 = arith.constant 57 : index
      %121 = vector.load %arg8[%c0_101, %c57_102] : memref<2x138xf32, #tpu.memory_space<vmem>>, vector<2x3xf32>
      tpu.vector_store %arg8[%c0_101, %c57_102], %120 {strides = array<i32>} : memref<2x138xf32, #tpu.memory_space<vmem>>, vector<2x3xf32>,
      %c1_103 = arith.constant 1 : index
      %c0_104 = arith.constant 0 : index
      %c122 = arith.constant 122 : index
      %122 = vector.load %arg7[%c1_103, %c0_104, %c122] : memref<2x2x1536xf32, #tpu.memory_space<vmem>>, vector<1x2x3xf32>
      %123 = vector.shape_cast %122 : vector<1x2x3xf32> to vector<2x3xf32>
      %c0_105 = arith.constant 0 : index
      %c60 = arith.constant 60 : index
      %124 = vector.load %arg8[%c0_105, %c60] : memref<2x138xf32, #tpu.memory_space<vmem>>, vector<2x3xf32>
      tpu.vector_store %arg8[%c0_105, %c60], %123 {strides = array<i32>} : memref<2x138xf32, #tpu.memory_space<vmem>>, vector<2x3xf32>,
      %c1_106 = arith.constant 1 : index
      %c0_107 = arith.constant 0 : index
      %c1028 = arith.constant 1028 : index
      %125 = vector.load %arg7[%c1_106, %c0_107, %c1028] : memref<2x2x1536xf32, #tpu.memory_space<vmem>>, vector<1x2x3xf32>
      %126 = vector.shape_cast %125 : vector<1x2x3xf32> to vector<2x3xf32>
      %c0_108 = arith.constant 0 : index
      %c63 = arith.constant 63 : index
      %127 = vector.load %arg8[%c0_108, %c63] : memref<2x138xf32, #tpu.memory_space<vmem>>, vector<2x3xf32>
      tpu.vector_store %arg8[%c0_108, %c63], %126 {strides = array<i32>} : memref<2x138xf32, #tpu.memory_space<vmem>>, vector<2x3xf32>,
      %c1_109 = arith.constant 1 : index
      %c0_110 = arith.constant 0 : index
      %c1349 = arith.constant 1349 : index
      %128 = vector.load %arg7[%c1_109, %c0_110, %c1349] : memref<2x2x1536xf32, #tpu.memory_space<vmem>>, vector<1x2x3xf32>
      %129 = vector.shape_cast %128 : vector<1x2x3xf32> to vector<2x3xf32>
      %c0_111 = arith.constant 0 : index
      %c66 = arith.constant 66 : index
      %130 = vector.load %arg8[%c0_111, %c66] : memref<2x138xf32, #tpu.memory_space<vmem>>, vector<2x3xf32>
      tpu.vector_store %arg8[%c0_111, %c66], %129 {strides = array<i32>} : memref<2x138xf32, #tpu.memory_space<vmem>>, vector<2x3xf32>,
      %c1_112 = arith.constant 1 : index
      %c0_113 = arith.constant 0 : index
      %c1292 = arith.constant 1292 : index
      %131 = vector.load %arg7[%c1_112, %c0_113, %c1292] : memref<2x2x1536xf32, #tpu.memory_space<vmem>>, vector<1x2x3xf32>
      %132 = vector.shape_cast %131 : vector<1x2x3xf32> to vector<2x3xf32>
      %c0_114 = arith.constant 0 : index
      %c69 = arith.constant 69 : index
      %133 = vector.load %arg8[%c0_114, %c69] : memref<2x138xf32, #tpu.memory_space<vmem>>, vector<2x3xf32>
      tpu.vector_store %arg8[%c0_114, %c69], %132 {strides = array<i32>} : memref<2x138xf32, #tpu.memory_space<vmem>>, vector<2x3xf32>,
      %c1_115 = arith.constant 1 : index
      %c0_116 = arith.constant 0 : index
      %c1505 = arith.constant 1505 : index
      %134 = vector.load %arg7[%c1_115, %c0_116, %c1505] : memref<2x2x1536xf32, #tpu.memory_space<vmem>>, vector<1x2x3xf32>
      %135 = vector.shape_cast %134 : vector<1x2x3xf32> to vector<2x3xf32>
      %c0_117 = arith.constant 0 : index
      %c72 = arith.constant 72 : index
      %136 = vector.load %arg8[%c0_117, %c72] : memref<2x138xf32, #tpu.memory_space<vmem>>, vector<2x3xf32>
      tpu.vector_store %arg8[%c0_117, %c72], %135 {strides = array<i32>} : memref<2x138xf32, #tpu.memory_space<vmem>>, vector<2x3xf32>,
      %c1_118 = arith.constant 1 : index
      %c0_119 = arith.constant 0 : index
      %c0_120 = arith.constant 0 : index
      %137 = vector.load %arg3[%c1_118, %c0_119, %c0_120] : memref<2x2x1920xf32, #tpu.memory_space<vmem>>, vector<1x2x3xf32>
      %138 = vector.shape_cast %137 : vector<1x2x3xf32> to vector<2x3xf32>
      %c0_121 = arith.constant 0 : index
      %c75 = arith.constant 75 : index
      %139 = vector.load %arg8[%c0_121, %c75] : memref<2x138xf32, #tpu.memory_space<vmem>>, vector<2x3xf32>
      tpu.vector_store %arg8[%c0_121, %c75], %138 {strides = array<i32>} : memref<2x138xf32, #tpu.memory_space<vmem>>, vector<2x3xf32>,
      %c0_122 = arith.constant 0 : index
      %c78 = arith.constant 78 : index
      %140 = vector.load %arg8[%c0_122, %c78] : memref<2x138xf32, #tpu.memory_space<vmem>>, vector<2x3xf32>
      tpu.vector_store %arg8[%c0_122, %c78], %138 {strides = array<i32>} : memref<2x138xf32, #tpu.memory_space<vmem>>, vector<2x3xf32>,
      %c0_123 = arith.constant 0 : index
      %c81 = arith.constant 81 : index
      %141 = vector.load %arg8[%c0_123, %c81] : memref<2x138xf32, #tpu.memory_space<vmem>>, vector<2x3xf32>
      tpu.vector_store %arg8[%c0_123, %c81], %138 {strides = array<i32>} : memref<2x138xf32, #tpu.memory_space<vmem>>, vector<2x3xf32>,
      %c0_124 = arith.constant 0 : index
      %c84 = arith.constant 84 : index
      %142 = vector.load %arg8[%c0_124, %c84] : memref<2x138xf32, #tpu.memory_space<vmem>>, vector<2x3xf32>
      tpu.vector_store %arg8[%c0_124, %c84], %138 {strides = array<i32>} : memref<2x138xf32, #tpu.memory_space<vmem>>, vector<2x3xf32>,
      %c0_125 = arith.constant 0 : index
      %c87 = arith.constant 87 : index
      %143 = vector.load %arg8[%c0_125, %c87] : memref<2x138xf32, #tpu.memory_space<vmem>>, vector<2x3xf32>
      tpu.vector_store %arg8[%c0_125, %c87], %138 {strides = array<i32>} : memref<2x138xf32, #tpu.memory_space<vmem>>, vector<2x3xf32>,
      %c0_126 = arith.constant 0 : index
      %c90 = arith.constant 90 : index
      %144 = vector.load %arg8[%c0_126, %c90] : memref<2x138xf32, #tpu.memory_space<vmem>>, vector<2x3xf32>
      tpu.vector_store %arg8[%c0_126, %c90], %138 {strides = array<i32>} : memref<2x138xf32, #tpu.memory_space<vmem>>, vector<2x3xf32>,
      %c0_127 = arith.constant 0 : index
      %c93 = arith.constant 93 : index
      %145 = vector.load %arg8[%c0_127, %c93] : memref<2x138xf32, #tpu.memory_space<vmem>>, vector<2x3xf32>
      tpu.vector_store %arg8[%c0_127, %c93], %138 {strides = array<i32>} : memref<2x138xf32, #tpu.memory_space<vmem>>, vector<2x3xf32>,
      %c0_128 = arith.constant 0 : index
      %c132 = arith.constant 132 : index
      %146 = vector.load %arg8[%c0_128, %c132] : memref<2x138xf32, #tpu.memory_space<vmem>>, vector<2x3xf32>
      tpu.vector_store %arg8[%c0_128, %c132], %138 {strides = array<i32>} : memref<2x138xf32, #tpu.memory_space<vmem>>, vector<2x3xf32>,
      %c0_129 = arith.constant 0 : index
      %c135 = arith.constant 135 : index
      %147 = vector.load %arg8[%c0_129, %c135] : memref<2x138xf32, #tpu.memory_space<vmem>>, vector<2x3xf32>
      tpu.vector_store %arg8[%c0_129, %c135], %138 {strides = array<i32>} : memref<2x138xf32, #tpu.memory_space<vmem>>, vector<2x3xf32>,
      %c1_130 = arith.constant 1 : index
      %c0_131 = arith.constant 0 : index
      %c988 = arith.constant 988 : index
      %148 = vector.load %arg5[%c1_130, %c0_131, %c988] : memref<2x2x1280xf32, #tpu.memory_space<vmem>>, vector<1x2x3xf32>
      %149 = vector.shape_cast %148 : vector<1x2x3xf32> to vector<2x3xf32>
      %c0_132 = arith.constant 0 : index
      %c96 = arith.constant 96 : index
      %150 = vector.load %arg8[%c0_132, %c96] : memref<2x138xf32, #tpu.memory_space<vmem>>, vector<2x3xf32>
      tpu.vector_store %arg8[%c0_132, %c96], %149 {strides = array<i32>} : memref<2x138xf32, #tpu.memory_space<vmem>>, vector<2x3xf32>,
      %c1_133 = arith.constant 1 : index
      %c0_134 = arith.constant 0 : index
      %c724 = arith.constant 724 : index
      %151 = vector.load %arg5[%c1_133, %c0_134, %c724] : memref<2x2x1280xf32, #tpu.memory_space<vmem>>, vector<1x2x3xf32>
      %152 = vector.shape_cast %151 : vector<1x2x3xf32> to vector<2x3xf32>
      %c0_135 = arith.constant 0 : index
      %c99 = arith.constant 99 : index
      %153 = vector.load %arg8[%c0_135, %c99] : memref<2x138xf32, #tpu.memory_space<vmem>>, vector<2x3xf32>
      tpu.vector_store %arg8[%c0_135, %c99], %152 {strides = array<i32>} : memref<2x138xf32, #tpu.memory_space<vmem>>, vector<2x3xf32>,
      %c1_136 = arith.constant 1 : index
      %c0_137 = arith.constant 0 : index
      %c121 = arith.constant 121 : index
      %154 = vector.load %arg5[%c1_136, %c0_137, %c121] : memref<2x2x1280xf32, #tpu.memory_space<vmem>>, vector<1x2x3xf32>
      %155 = vector.shape_cast %154 : vector<1x2x3xf32> to vector<2x3xf32>
      %c0_138 = arith.constant 0 : index
      %c102 = arith.constant 102 : index
      %156 = vector.load %arg8[%c0_138, %c102] : memref<2x138xf32, #tpu.memory_space<vmem>>, vector<2x3xf32>
      tpu.vector_store %arg8[%c0_138, %c102], %155 {strides = array<i32>} : memref<2x138xf32, #tpu.memory_space<vmem>>, vector<2x3xf32>,
      %c1_139 = arith.constant 1 : index
      %c0_140 = arith.constant 0 : index
      %c451 = arith.constant 451 : index
      %157 = vector.load %arg5[%c1_139, %c0_140, %c451] : memref<2x2x1280xf32, #tpu.memory_space<vmem>>, vector<1x2x3xf32>
      %158 = vector.shape_cast %157 : vector<1x2x3xf32> to vector<2x3xf32>
      %c0_141 = arith.constant 0 : index
      %c105 = arith.constant 105 : index
      %159 = vector.load %arg8[%c0_141, %c105] : memref<2x138xf32, #tpu.memory_space<vmem>>, vector<2x3xf32>
      tpu.vector_store %arg8[%c0_141, %c105], %158 {strides = array<i32>} : memref<2x138xf32, #tpu.memory_space<vmem>>, vector<2x3xf32>,
      %c1_142 = arith.constant 1 : index
      %c0_143 = arith.constant 0 : index
      %c811 = arith.constant 811 : index
      %160 = vector.load %arg6[%c1_142, %c0_143, %c811] : memref<2x2x1024xf32, #tpu.memory_space<vmem>>, vector<1x2x3xf32>
      %161 = vector.shape_cast %160 : vector<1x2x3xf32> to vector<2x3xf32>
      %c0_144 = arith.constant 0 : index
      %c108 = arith.constant 108 : index
      %162 = vector.load %arg8[%c0_144, %c108] : memref<2x138xf32, #tpu.memory_space<vmem>>, vector<2x3xf32>
      tpu.vector_store %arg8[%c0_144, %c108], %161 {strides = array<i32>} : memref<2x138xf32, #tpu.memory_space<vmem>>, vector<2x3xf32>,
      %c1_145 = arith.constant 1 : index
      %c0_146 = arith.constant 0 : index
      %c823 = arith.constant 823 : index
      %163 = vector.load %arg6[%c1_145, %c0_146, %c823] : memref<2x2x1024xf32, #tpu.memory_space<vmem>>, vector<1x2x3xf32>
      %164 = vector.shape_cast %163 : vector<1x2x3xf32> to vector<2x3xf32>
      %c0_147 = arith.constant 0 : index
      %c111 = arith.constant 111 : index
      %165 = vector.load %arg8[%c0_147, %c111] : memref<2x138xf32, #tpu.memory_space<vmem>>, vector<2x3xf32>
      tpu.vector_store %arg8[%c0_147, %c111], %164 {strides = array<i32>} : memref<2x138xf32, #tpu.memory_space<vmem>>, vector<2x3xf32>,
      %c1_148 = arith.constant 1 : index
      %c0_149 = arith.constant 0 : index
      %c109 = arith.constant 109 : index
      %166 = vector.load %arg6[%c1_148, %c0_149, %c109] : memref<2x2x1024xf32, #tpu.memory_space<vmem>>, vector<1x2x3xf32>
      %167 = vector.shape_cast %166 : vector<1x2x3xf32> to vector<2x3xf32>
      %c0_150 = arith.constant 0 : index
      %c114 = arith.constant 114 : index
      %168 = vector.load %arg8[%c0_150, %c114] : memref<2x138xf32, #tpu.memory_space<vmem>>, vector<2x3xf32>
      tpu.vector_store %arg8[%c0_150, %c114], %167 {strides = array<i32>} : memref<2x138xf32, #tpu.memory_space<vmem>>, vector<2x3xf32>,
      %c1_151 = arith.constant 1 : index
      %c0_152 = arith.constant 0 : index
      %c439 = arith.constant 439 : index
      %169 = vector.load %arg6[%c1_151, %c0_152, %c439] : memref<2x2x1024xf32, #tpu.memory_space<vmem>>, vector<1x2x3xf32>
      %170 = vector.shape_cast %169 : vector<1x2x3xf32> to vector<2x3xf32>
      %c0_153 = arith.constant 0 : index
      %c117 = arith.constant 117 : index
      %171 = vector.load %arg8[%c0_153, %c117] : memref<2x138xf32, #tpu.memory_space<vmem>>, vector<2x3xf32>
      tpu.vector_store %arg8[%c0_153, %c117], %170 {strides = array<i32>} : memref<2x138xf32, #tpu.memory_space<vmem>>, vector<2x3xf32>,
      %c1_154 = arith.constant 1 : index
      %c0_155 = arith.constant 0 : index
      %c1205 = arith.constant 1205 : index
      %172 = vector.load %arg7[%c1_154, %c0_155, %c1205] : memref<2x2x1536xf32, #tpu.memory_space<vmem>>, vector<1x2x3xf32>
      %173 = vector.shape_cast %172 : vector<1x2x3xf32> to vector<2x3xf32>
      %c0_156 = arith.constant 0 : index
      %c120 = arith.constant 120 : index
      %174 = vector.load %arg8[%c0_156, %c120] : memref<2x138xf32, #tpu.memory_space<vmem>>, vector<2x3xf32>
      tpu.vector_store %arg8[%c0_156, %c120], %173 {strides = array<i32>} : memref<2x138xf32, #tpu.memory_space<vmem>>, vector<2x3xf32>,
      %c1_157 = arith.constant 1 : index
      %c0_158 = arith.constant 0 : index
      %c1094 = arith.constant 1094 : index
      %175 = vector.load %arg7[%c1_157, %c0_158, %c1094] : memref<2x2x1536xf32, #tpu.memory_space<vmem>>, vector<1x2x3xf32>
      %176 = vector.shape_cast %175 : vector<1x2x3xf32> to vector<2x3xf32>
      %c0_159 = arith.constant 0 : index
      %c123 = arith.constant 123 : index
      %177 = vector.load %arg8[%c0_159, %c123] : memref<2x138xf32, #tpu.memory_space<vmem>>, vector<2x3xf32>
      tpu.vector_store %arg8[%c0_159, %c123], %176 {strides = array<i32>} : memref<2x138xf32, #tpu.memory_space<vmem>>, vector<2x3xf32>,
      %c1_160 = arith.constant 1 : index
      %c0_161 = arith.constant 0 : index
      %c692 = arith.constant 692 : index
      %178 = vector.load %arg7[%c1_160, %c0_161, %c692] : memref<2x2x1536xf32, #tpu.memory_space<vmem>>, vector<1x2x3xf32>
      %179 = vector.shape_cast %178 : vector<1x2x3xf32> to vector<2x3xf32>
      %c0_162 = arith.constant 0 : index
      %c126 = arith.constant 126 : index
      %180 = vector.load %arg8[%c0_162, %c126] : memref<2x138xf32, #tpu.memory_space<vmem>>, vector<2x3xf32>
      tpu.vector_store %arg8[%c0_162, %c126], %179 {strides = array<i32>} : memref<2x138xf32, #tpu.memory_space<vmem>>, vector<2x3xf32>,
      %c1_163 = arith.constant 1 : index
      %c0_164 = arith.constant 0 : index
      %c899 = arith.constant 899 : index
      %181 = vector.load %arg7[%c1_163, %c0_164, %c899] : memref<2x2x1536xf32, #tpu.memory_space<vmem>>, vector<1x2x3xf32>
      %182 = vector.shape_cast %181 : vector<1x2x3xf32> to vector<2x3xf32>
      %c0_165 = arith.constant 0 : index
      %c129 = arith.constant 129 : index
      %183 = vector.load %arg8[%c0_165, %c129] : memref<2x138xf32, #tpu.memory_space<vmem>>, vector<2x3xf32>
      tpu.vector_store %arg8[%c0_165, %c129], %182 {strides = array<i32>} : memref<2x138xf32, #tpu.memory_space<vmem>>, vector<2x3xf32>,
    } else {
    }
    %c2_i32_38 = arith.constant 2 : i32
    %56 = arith.muli %arg0, %c2_i32_38 : i32
    %c0_i32_39 = arith.constant 0 : i32
    %57 = arith.minsi %56, %c0_i32_39 : i32
    %c0_i32_40 = arith.constant 0 : i32
    %58 = tpu.memref_slice %arg2[%57, %c0_i32_40] : memref<2x138xf32, #tpu.memory_space<any>> -> memref<2x138xf32, #tpu.memory_space<any>>
    tpu.enqueue_dma source(%arg8 : memref<2x138xf32, #tpu.memory_space<vmem>>) target(%58 : memref<2x138xf32, #tpu.memory_space<any>>) target_semaphore(%arg10 : memref<!tpu.dma_semaphore, #tpu.memory_space<semaphore_mem>>)
    %c0_i32_41 = arith.constant 0 : i32
    %59 = arith.cmpi eq, %arg0, %c0_i32_41 : i32
    %60 = arith.extui %59 : i1 to i32
    %c0_i32_42 = arith.constant 0 : i32
    %61 = arith.cmpi ne, %60, %c0_i32_42 : i32
    scf.if %61 {
      %c0_i32_43 = arith.constant 0 : i32
      %c0_i32_44 = arith.constant 0 : i32
      %62 = arith.minsi %c0_i32_43, %c0_i32_44 : i32
      %c0_i32_45 = arith.constant 0 : i32
      %63 = tpu.memref_slice %arg2[%62, %c0_i32_45] : memref<2x138xf32, #tpu.memory_space<any>> -> memref<2x138xf32, #tpu.memory_space<any>>
      tpu.wait_dma2 semaphore(%arg10 : memref<!tpu.dma_semaphore, #tpu.memory_space<semaphore_mem>>) src(%arg8 : memref<2x138xf32, #tpu.memory_space<vmem>>) dst(%63 : memref<2x138xf32, #tpu.memory_space<any>>)
    } else {
    }
    return
  }
}

</mosaic_0001>

<llo_original>
// kernel: tpu_custom_call.1
$region0: #{tpu_custom_call.1}
  #allocation0 [shape = 'u32[]', space=smem, size = 0x4, offset = 0x4, fixed_abs, tag = 'smem constant byte address 0x4 - core index']
  #allocation1 [shape = 'u32[144,128]{1,0:T(1,128)}', space=vmem, size = 0x12000, scoped, tag = 'internal scratch']
  #allocation2 [shape = 'f32[2,2,1920]{2,1,0:T(2,128)}', space=vmem, size = 0x7800, scoped, tag = 'scratch operand']
  #allocation3 [shape = 'f32[2,2,1408]{2,1,0:T(2,128)}', space=vmem, size = 0x5800, scoped, tag = 'scratch operand']
  #allocation4 [shape = 'f32[2,2,1280]{2,1,0:T(2,128)}', space=vmem, size = 0x5000, scoped, tag = 'scratch operand']
  #allocation5 [shape = 'f32[2,2,1024]{2,1,0:T(2,128)}', space=vmem, size = 0x4000, scoped, tag = 'scratch operand']
  #allocation6 [shape = 'f32[2,2,1536]{2,1,0:T(2,128)}', space=vmem, size = 0x6000, scoped, tag = 'scratch operand']
  #allocation7 [shape = 'f32[2,138]{1,0:T(2,128)}', space=vmem, size = 0x800, scoped, tag = 'scratch operand']
  #allocation8 [shape = 's32[10]{0}', space=sflag, size = 0x28, scoped, tag = 'scratch operand']
  #allocation9 [shape = 's32[1]{0}', space=sflag, size = 0x4, scoped, tag = 'scratch operand']
  #allocation10 [shape = 's32[]', space=sflag, size = 0x4, offset = 0, fixed_abs, tag = 'sflag constant byte address 0x0 - dummy sync flag']
  #allocation11 [shape = 's32[]', space=sflag, size = 0x4, offset = 0, fixed_abs, tag = 'sflag constant byte address 0x0 - dummy sync flag']
  #allocation12 [shape = 'u32[]', space=smem, size = 0x4, offset = 0x44, fixed_abs, tag = 'smem constant byte address 0x44 - assertion arg 0']
  #allocation13 [shape = 'u32[]', space=smem, size = 0x4, offset = 0x48, fixed_abs, tag = 'smem constant byte address 0x48 - assertion arg 1']
  #allocation14 [shape = 's32[]', space=sflag, size = 0x4, offset = 0, fixed_abs, tag = 'sflag constant byte address 0x0 - dummy sync flag']
  #allocation15 [shape = 's32[]', space=sflag, size = 0x4, offset = 0, fixed_abs, tag = 'sflag constant byte address 0x0 - dummy sync flag']
  #allocation16 [shape = 's32[]', space=sflag, size = 0x4, offset = 0, fixed_abs, tag = 'sflag constant byte address 0x0 - dummy sync flag']
  #allocation17 [shape = 's32[]', space=sflag, size = 0x4, offset = 0, fixed_abs, tag = 'sflag constant byte address 0x0 - dummy sync flag']
  #allocation18 [shape = 's32[]', space=sflag, size = 0x4, offset = 0, fixed_abs, tag = 'sflag constant byte address 0x0 - dummy sync flag']
  #allocation19 [shape = 's32[]', space=sflag, size = 0x4, offset = 0, fixed_abs, tag = 'sflag constant byte address 0x0 - dummy sync flag']
  #allocation20 [shape = 's32[]', space=sflag, size = 0x4, offset = 0, fixed_abs, tag = 'sflag constant byte address 0x0 - dummy sync flag']
  #allocation21 [shape = 's32[]', space=sflag, size = 0x4, offset = 0, fixed_abs, tag = 'sflag constant byte address 0x0 - dummy sync flag']
  #allocation22 [shape = 's32[]', space=sflag, size = 0x4, offset = 0, fixed_abs, tag = 'sflag constant byte address 0x0 - dummy sync flag']
  #allocation23 [shape = 's32[]', space=sflag, size = 0x4, offset = 0, fixed_abs, tag = 'sflag constant byte address 0x0 - dummy sync flag']
  #allocation24 [shape = 's32[]', space=sflag, size = 0x4, offset = 0, fixed_abs, tag = 'sflag constant byte address 0x0 - dummy sync flag']
  #allocation25 [shape = 's32[]', space=sflag, size = 0x4, offset = 0, fixed_abs, tag = 'sflag constant byte address 0x0 - dummy sync flag']
  #allocation26 [shape = 's32[]', space=sflag, size = 0x4, offset = 0, fixed_abs, tag = 'sflag constant byte address 0x0 - dummy sync flag']
  #allocation27 [shape = 's32[]', space=sflag, size = 0x4, offset = 0, fixed_abs, tag = 'sflag constant byte address 0x0 - dummy sync flag']
  #allocation28 [shape = 's32[]', space=sflag, size = 0x4, offset = 0, fixed_abs, tag = 'sflag constant byte address 0x0 - dummy sync flag']
  #allocation29 [shape = 's32[]', space=sflag, size = 0x4, offset = 0, fixed_abs, tag = 'sflag constant byte address 0x0 - dummy sync flag']
  #allocation30 [shape = 's32[]', space=sflag, size = 0x4, offset = 0, fixed_abs, tag = 'sflag constant byte address 0x0 - dummy sync flag']
  #allocation31 [shape = 's32[]', space=sflag, size = 0x4, offset = 0, fixed_abs, tag = 'sflag constant byte address 0x0 - dummy sync flag']
  #allocation32 [shape = 's32[]', space=sflag, size = 0x4, offset = 0, fixed_abs, tag = 'sflag constant byte address 0x0 - dummy sync flag']
  #allocation33 [shape = 's32[]', space=sflag, size = 0x4, offset = 0, fixed_abs, tag = 'sflag constant byte address 0x0 - dummy sync flag']
  %s0 = inlined_call_operand.hbm [shape: f32[2,12120], index: 0, kind: input, shape index: {}]
  %s1 = inlined_call_operand.hbm [shape: f32[2,138], index: 1, kind: output, shape index: {}]
  %s2 = sld [smem:[#allocation0]]
  $region70: #{tpu_custom_call.1} parent=0
    _
  %s4 = ssub.s32 1, %s2
  %s5 = scalar_select 0, %s4, %s2
  %s6 = ssub.s32 0, 0
  %s7 = ssub.s32 0, 0
  %p8 = scmp.ne.s32.totalorder 0, 0
  %p9 = scmp.lt.s32.totalorder 0, 0
  %p10 = pnand %p9, %p8
  %p11 = pneg %p10
  %s12 = sadd.s32 0, 2
  %s13 = scalar_select %p11, %s12, 0
  %p14 = scmp.eq.s32.totalorder 0, 0
  // Predicated region
  $region2: #{tpu_custom_call.1} parent=0 // pred_check
    %p15 = pneg %p14
  $region3: #{tpu_custom_call.1} parent=0 // pred_check_branch
    %17 = sbr.rel (%p15) target = $region5
  $region4: #{tpu_custom_call.1} parent=0 // pred_region
    // Predicated region
    $region6: #{tpu_custom_call.1} parent=4 // pred_check
      _
    $region7: #{tpu_custom_call.1} parent=4 // pred_check_branch
      %19 = sbr.rel target = $region9
    $region8: #{tpu_custom_call.1} parent=4 // pred_region
      %20 = sst [smem:[#allocation12]] [#allocation11]
      %21 = sst [smem:[#allocation13]] [#allocation10]
    $region9: #{tpu_custom_call.1} parent=4 // pred_fallthru
      _
    %23 = shalt.err (0)
    %s25 = sshll.u32 [#allocation2], 4
    %s26 = int_to_ptr.vmem [resolvable:$true] %s25
    %28 = dma.hbm_to_vmem [thread:$0]  %s0, 480, %s26, [#allocation8]
    %s29 = scalar_lea.hbm %s0, 1024
    %s30 = scalar_lea.sflag [#allocation8], 1
    // Predicated region
    $region10: #{tpu_custom_call.1} parent=4 // pred_check
      _
    $region11: #{tpu_custom_call.1} parent=4 // pred_check_branch
      %32 = sbr.rel target = $region13
    $region12: #{tpu_custom_call.1} parent=4 // pred_region
      %33 = sst [smem:[#allocation12]] [#allocation15]
      %34 = sst [smem:[#allocation13]] [#allocation14]
    $region13: #{tpu_custom_call.1} parent=4 // pred_fallthru
      _
    %36 = shalt.err (0)
    %s38 = sshll.u32 [#allocation3], 4
    %s39 = int_to_ptr.vmem [resolvable:$true] %s38
    %41 = dma.hbm_to_vmem [thread:$0]  %s29, 352, %s39, %s30
    %s42 = scalar_lea.hbm %s0, 1568
    %s43 = scalar_lea.sflag [#allocation8], 2
    // Predicated region
    $region14: #{tpu_custom_call.1} parent=4 // pred_check
      _
    $region15: #{tpu_custom_call.1} parent=4 // pred_check_branch
      %45 = sbr.rel target = $region17
    $region16: #{tpu_custom_call.1} parent=4 // pred_region
      %46 = sst [smem:[#allocation12]] [#allocation17]
      %47 = sst [smem:[#allocation13]] [#allocation16]
    $region17: #{tpu_custom_call.1} parent=4 // pred_fallthru
      _
    %49 = shalt.err (0)
    %s51 = sshll.u32 [#allocation4], 4
    %s52 = int_to_ptr.vmem [resolvable:$true] %s51
    %54 = dma.hbm_to_vmem [thread:$0]  %s42, 320, %s52, %s43
    %s55 = scalar_lea.hbm %s0, 2144
    %s56 = scalar_lea.sflag [#allocation8], 3
    // Predicated region
    $region18: #{tpu_custom_call.1} parent=4 // pred_check
      _
    $region19: #{tpu_custom_call.1} parent=4 // pred_check_branch
      %58 = sbr.rel target = $region21
    $region20: #{tpu_custom_call.1} parent=4 // pred_region
      %59 = sst [smem:[#allocation12]] [#allocation19]
      %60 = sst [smem:[#allocation13]] [#allocation18]
    $region21: #{tpu_custom_call.1} parent=4 // pred_fallthru
      _
    %62 = shalt.err (0)
    %s64 = sshll.u32 [#allocation5], 4
    %s65 = int_to_ptr.vmem [resolvable:$true] %s64
    %67 = dma.hbm_to_vmem [thread:$0]  %s55, 256, %s65, %s56
    %s68 = scalar_lea.hbm %s0, 2560
    %s69 = scalar_lea.sflag [#allocation8], 4
    // Predicated region
    $region22: #{tpu_custom_call.1} parent=4 // pred_check
      _
    $region23: #{tpu_custom_call.1} parent=4 // pred_check_branch
      %71 = sbr.rel target = $region25
    $region24: #{tpu_custom_call.1} parent=4 // pred_region
      %72 = sst [smem:[#allocation12]] [#allocation21]
      %73 = sst [smem:[#allocation13]] [#allocation20]
    $region25: #{tpu_custom_call.1} parent=4 // pred_fallthru
      _
    %75 = shalt.err (0)
    %s77 = sshll.u32 [#allocation6], 4
    %s78 = int_to_ptr.vmem [resolvable:$true] %s77
    %80 = dma.hbm_to_vmem [thread:$0]  %s68, 384, %s78, %s69
  $region5: #{tpu_custom_call.1} parent=0 // pred_fallthru
    _
  %s81 = sadd.s32 0, 1
  %p82 = scmp.lt.s32.totalorder %s81, 1
  // Predicated region
  $region26: #{tpu_custom_call.1} parent=0 // pred_check
    %p83 = pneg %p82
  $region27: #{tpu_custom_call.1} parent=0 // pred_check_branch
    %85 = sbr.rel (%p83) target = $region29
  $region28: #{tpu_custom_call.1} parent=0 // pred_region
    %s86 = ssub.s32 1, %s13
    %s87 = smul.u32 %s81, 2
    %p88 = scmp.lt.s32.totalorder %s87, 0
    %s89 = scalar_select %p88, %s87, 0
    %s90 = sshra.s32 %s89, 1
    %s91 = sand.u32 %s89, 1
    %s92 = smul.u32 %s90, 95
    %s93 = smul.addr %s92, 32
    %s94 = scalar_lea.hbm %s0, %s93
    %s95 = smul.u32 %s86, 15
    %s96 = smul.addr %s95, 2
    %s97 = scalar_lea.vmem [#allocation2], %s96
    %s98 = smul.u32 %s86, 5
    %s99 = scalar_lea.sflag [#allocation8], %s98
    // Predicated region
    $region30: #{tpu_custom_call.1} parent=28 // pred_check
      _
    $region31: #{tpu_custom_call.1} parent=28 // pred_check_branch
      %101 = sbr.rel target = $region33
    $region32: #{tpu_custom_call.1} parent=28 // pred_region
      %102 = sst [smem:[#allocation12]] [#allocation23]
      %103 = sst [smem:[#allocation13]] [#allocation22]
    $region33: #{tpu_custom_call.1} parent=28 // pred_fallthru
      _
    %105 = shalt.err (0)
    %s107 = sshll.u32 %s97, 4
    %s108 = int_to_ptr.vmem [resolvable:$true] %s107
    %110 = dma.hbm_to_vmem [thread:$0]  %s94, 480, %s108, %s99
    %s111 = sadd.s32 32, %s92
    %s112 = smul.addr %s111, 32
    %s113 = scalar_lea.hbm %s0, %s112
    %s114 = smul.u32 %s86, 11
    %s115 = smul.addr %s114, 2
    %s116 = scalar_lea.vmem [#allocation3], %s115
    %s117 = sadd.s32 1, %s98
    %s118 = scalar_lea.sflag [#allocation8], %s117
    // Predicated region
    $region34: #{tpu_custom_call.1} parent=28 // pred_check
      _
    $region35: #{tpu_custom_call.1} parent=28 // pred_check_branch
      %120 = sbr.rel target = $region37
    $region36: #{tpu_custom_call.1} parent=28 // pred_region
      %121 = sst [smem:[#allocation12]] [#allocation25]
      %122 = sst [smem:[#allocation13]] [#allocation24]
    $region37: #{tpu_custom_call.1} parent=28 // pred_fallthru
      _
    %124 = shalt.err (0)
    %s126 = sshll.u32 %s116, 4
    %s127 = int_to_ptr.vmem [resolvable:$true] %s126
    %129 = dma.hbm_to_vmem [thread:$0]  %s113, 352, %s127, %s118
    %s130 = sadd.s32 49, %s92
    %s131 = smul.addr %s130, 32
    %s132 = scalar_lea.hbm %s0, %s131
    %s133 = smul.u32 %s86, 10
    %s134 = smul.addr %s133, 2
    %s135 = scalar_lea.vmem [#allocation4], %s134
    %s136 = sadd.s32 2, %s98
    %s137 = scalar_lea.sflag [#allocation8], %s136
    // Predicated region
    $region38: #{tpu_custom_call.1} parent=28 // pred_check
      _
    $region39: #{tpu_custom_call.1} parent=28 // pred_check_branch
      %139 = sbr.rel target = $region41
    $region40: #{tpu_custom_call.1} parent=28 // pred_region
      %140 = sst [smem:[#allocation12]] [#allocation27]
      %141 = sst [smem:[#allocation13]] [#allocation26]
    $region41: #{tpu_custom_call.1} parent=28 // pred_fallthru
      _
    %143 = shalt.err (0)
    %s145 = sshll.u32 %s135, 4
    %s146 = int_to_ptr.vmem [resolvable:$true] %s145
    %148 = dma.hbm_to_vmem [thread:$0]  %s132, 320, %s146, %s137
    %s149 = sadd.s32 67, %s92
    %s150 = smul.addr %s149, 32
    %s151 = scalar_lea.hbm %s0, %s150
    %s152 = smul.u32 %s86, 8
    %s153 = smul.addr %s152, 2
    %s154 = scalar_lea.vmem [#allocation5], %s153
    %s155 = sadd.s32 3, %s98
    %s156 = scalar_lea.sflag [#allocation8], %s155
    // Predicated region
    $region42: #{tpu_custom_call.1} parent=28 // pred_check
      _
    $region43: #{tpu_custom_call.1} parent=28 // pred_check_branch
      %158 = sbr.rel target = $region45
    $region44: #{tpu_custom_call.1} parent=28 // pred_region
      %159 = sst [smem:[#allocation12]] [#allocation29]
      %160 = sst [smem:[#allocation13]] [#allocation28]
    $region45: #{tpu_custom_call.1} parent=28 // pred_fallthru
      _
    %162 = shalt.err (0)
    %s164 = sshll.u32 %s154, 4
    %s165 = int_to_ptr.vmem [resolvable:$true] %s164
    %167 = dma.hbm_to_vmem [thread:$0]  %s151, 256, %s165, %s156
    %s168 = sadd.s32 80, %s92
    %s169 = smul.addr %s168, 32
    %s170 = scalar_lea.hbm %s0, %s169
    %s171 = smul.u32 %s86, 12
    %s172 = smul.addr %s171, 2
    %s173 = scalar_lea.vmem [#allocation6], %s172
    %s174 = sadd.s32 4, %s98
    %s175 = scalar_lea.sflag [#allocation8], %s174
    // Predicated region
    $region46: #{tpu_custom_call.1} parent=28 // pred_check
      _
    $region47: #{tpu_custom_call.1} parent=28 // pred_check_branch
      %177 = sbr.rel target = $region49
    $region48: #{tpu_custom_call.1} parent=28 // pred_region
      %178 = sst [smem:[#allocation12]] [#allocation31]
      %179 = sst [smem:[#allocation13]] [#allocation30]
    $region49: #{tpu_custom_call.1} parent=28 // pred_fallthru
      _
    %181 = shalt.err (0)
    %s183 = sshll.u32 %s173, 4
    %s184 = int_to_ptr.vmem [resolvable:$true] %s183
    %186 = dma.hbm_to_vmem [thread:$0]  %s170, 384, %s184, %s175
  $region29: #{tpu_custom_call.1} parent=0 // pred_fallthru
    _
  %p187 = scmp.gt.s32.totalorder 0, 0
  // Predicated region
  $region50: #{tpu_custom_call.1} parent=0 // pred_check
    %p188 = pneg %p187
  $region51: #{tpu_custom_call.1} parent=0 // pred_check_branch
    %190 = sbr.rel (%p188) target = $region53
  $region52: #{tpu_custom_call.1} parent=0 // pred_region
    %s191 = smul.u32 2, 1
    %s192 = smul.u32 %s191, 2
    %s193 = sshll.u32 %s192, 4
    %194 = dma.done [#allocation9], %s193
  $region53: #{tpu_custom_call.1} parent=0 // pred_fallthru
    _
  %s195 = smul.u32 %s13, 5
  %s196 = scalar_lea.sflag [#allocation8], %s195
  %s197 = smul.u32 2, 1
  %s198 = smul.u32 %s197, 15
  %s199 = sshll.u32 %s198, 4
  %200 = dma.done %s196, %s199
  %s201 = sadd.s32 1, %s195
  %s202 = scalar_lea.sflag [#allocation8], %s201
  %s203 = smul.u32 %s197, 11
  %s204 = sshll.u32 %s203, 4
  %205 = dma.done %s202, %s204
  %s206 = sadd.s32 2, %s195
  %s207 = scalar_lea.sflag [#allocation8], %s206
  %s208 = smul.u32 %s197, 10
  %s209 = sshll.u32 %s208, 4
  %210 = dma.done %s207, %s209
  %s211 = sadd.s32 3, %s195
  %s212 = scalar_lea.sflag [#allocation8], %s211
  %s213 = smul.u32 %s197, 8
  %s214 = sshll.u32 %s213, 4
  %215 = dma.done %s212, %s214
  %s216 = sadd.s32 4, %s195
  %s217 = scalar_lea.sflag [#allocation8], %s216
  %s218 = smul.u32 %s197, 12
  %s219 = sshll.u32 %s218, 4
  %220 = dma.done %s217, %s219
  %p221 = scmp.eq.s32.totalorder %s13, 0
  // Predicated region
  $region54: #{tpu_custom_call.1} parent=0 // pred_check
    %p222 = pneg %p221
  $region55: #{tpu_custom_call.1} parent=0 // pred_check_branch
    %224 = sbr.rel (%p222) target = $region57
  $region56: #{tpu_custom_call.1} parent=0 // pred_region
    %v225 = vld [vmem:[#allocation3] sm:$0x3]
    %227 = vrot.lane.b32.xlu0 %v225, 78
    %v228 = vpop.permute.xlu0 %227
    %vm230 = vcmask 17408
    %231 = vst.msk [vmem:[#allocation7] sm:$0x3] %vm230, %v228
    %v232 = vld [vmem:[#allocation3 + $0x6] sm:$0x3]
    %234 = vrot.lane.b32.xlu0 %v232, 45
    %v235 = vpop.permute.xlu0 %234
    %vm237 = vcmask 42008
    %238 = vst.msk [vmem:[#allocation7] sm:$0x3] %vm237, %v235
    %v239 = vld [vmem:[#allocation3 + $0x8] sm:$0x3]
    %241 = vrot.lane.b32.xlu0 %v239, 119
    %v242 = vpop.permute.xlu0 %241
    %vm244 = vcmask 66608
    %245 = vst.msk [vmem:[#allocation7] sm:$0x3] %vm244, %v242
    %v246 = vld [vmem:[#allocation3 + $0xe] sm:$0x3]
    %vm247 = vcmask 91208
    %248 = vst.msk [vmem:[#allocation7] sm:$0x3] %vm247, %v246
    %v249 = vld [vmem:[#allocation3 + $0x4] sm:$0xf]
    %251 = vrot.lane.b32.xlu0 %v249, 13
    %v252 = vpop.permute.xlu0 %251
    %v253 = vrot.slane %v252, 2
    %vm254 = vcmask 105472
    %v255 = vsel %vm254, %v252, %v253
    %vm257 = vcmask 115808
    %258 = vst.msk [vmem:[#allocation7] sm:$0x3] %vm257, %v255
    %v259 = vld [vmem:[#allocation2 + $0x14] sm:$0x3]
    %261 = vrot.lane.b32.xlu0 %v259, 11
    %v262 = vpop.permute.xlu0 %261
    %vm264 = vcmask 140408
    %265 = vst.msk [vmem:[#allocation7] sm:$0x3] %vm264, %v262
    %v266 = vld [vmem:[#allocation2 + $0x8] sm:$0x3]
    %268 = vrot.lane.b32.xlu0 %v266, 121
    %v269 = vpop.permute.xlu0 %268
    %vm271 = vcmask 165008
    %272 = vst.msk [vmem:[#allocation7] sm:$0x3] %vm271, %v269
    %v273 = vld [vmem:[#allocation3 + $0x14] sm:$0x3]
    %275 = vrot.lane.b32.xlu0 %v273, 107
    %v276 = vpop.permute.xlu0 %275
    %vm278 = vcmask 189608
    %279 = vst.msk [vmem:[#allocation7] sm:$0x3] %vm278, %v276
    %v280 = vld [vmem:[#allocation4 + $0x8] sm:$0x3]
    %282 = vrot.lane.b32.xlu0 %v280, 69
    %v283 = vpop.permute.xlu0 %282
    %vm285 = vcmask 214208
    %286 = vst.msk [vmem:[#allocation7] sm:$0x3] %vm285, %v283
    %v287 = vld [vmem:[#allocation4 + $0xe] sm:$0x3]
    %289 = vrot.lane.b32.xlu0 %v287, 99
    %v290 = vpop.permute.xlu0 %289
    %vm292 = vcmask 238808
    %293 = vst.msk [vmem:[#allocation7] sm:$0x3] %vm292, %v290
    %v294 = vld [vmem:[#allocation4 + $0xe] sm:$0x3]
    %296 = vrot.lane.b32.xlu0 %v294, 111
    %v297 = vpop.permute.xlu0 %296
    %vm299 = vcmask 263408
    %300 = vst.msk [vmem:[#allocation7] sm:$0x3] %vm299, %v297
    %v301 = vld [vmem:[#allocation4 + $0x10] sm:$0x3]
    %303 = vrot.lane.b32.xlu0 %v301, 3
    %v304 = vpop.permute.xlu0 %303
    %vm306 = vcmask 288008
    %307 = vst.msk [vmem:[#allocation7] sm:$0x3] %vm306, %v304
    %v308 = vld [vmem:[#allocation2] sm:$0x3]
    %310 = vrot.lane.b32.xlu0 %v308, 107
    %v311 = vpop.permute.xlu0 %310
    %vm313 = vcmask 312608
    %314 = vst.msk [vmem:[#allocation7] sm:$0x3] %vm313, %v311
    %v315 = vld [vmem:[#allocation4 + $0x12] sm:$0x3]
    %317 = vrot.lane.b32.xlu0 %v315, 79
    %v318 = vpop.permute.xlu0 %317
    %vm320 = vcmask 337208
    %321 = vst.msk [vmem:[#allocation7] sm:$0x3] %vm320, %v318
    %v322 = vld [vmem:[#allocation5 + $0x6] sm:$0x3]
    %324 = vrot.lane.b32.xlu0 %v322, 82
    %v325 = vpop.permute.xlu0 %324
    %vm327 = vcmask 361808
    %328 = vst.msk [vmem:[#allocation7] sm:$0x3] %vm327, %v325
    %v329 = vld [vmem:[#allocation5 + $0xe] sm:$0x3]
    %331 = vrot.lane.b32.xlu0 %v329, 25
    %v332 = vpop.permute.xlu0 %331
    %vm334 = vcmask 386408
    %335 = vst.msk [vmem:[#allocation7] sm:$0x3] %vm334, %v332
    %v336 = vld [vmem:[#allocation5 + $0x8] sm:$0x3]
    %338 = vrot.lane.b32.xlu0 %v336, 117
    %v339 = vpop.permute.xlu0 %338
    %vm341 = vcmask 411008
    %342 = vst.msk [vmem:[#allocation7] sm:$0x3] %vm341, %v339
    %v343 = vld [vmem:[#allocation5 + $0x8] sm:$0x3]
    %345 = vrot.lane.b32.xlu0 %v343, 87
    %v346 = vpop.permute.xlu0 %345
    %vm348 = vcmask 435608
    %349 = vst.msk [vmem:[#allocation7] sm:$0x3] %vm348, %v346
    %v350 = vld [vmem:[#allocation2 + $0x10] sm:$0x3]
    %352 = vrot.lane.b32.xlu0 %v350, 114
    %v353 = vpop.permute.xlu0 %352
    %vm355 = vcmask 460208
    %356 = vst.msk [vmem:[#allocation7] sm:$0x3] %vm355, %v353
    %v357 = vld [vmem:[#allocation2 + $0x1c] sm:$0x3]
    %359 = vrot.lane.b32.xlu0 %v357, 99
    %v360 = vpop.permute.xlu0 %359
    %vm362 = vcmask 484808
    %363 = vst.msk [vmem:[#allocation7] sm:$0x3] %vm362, %v360
    %v364 = vld [vmem:[#allocation6] sm:$0x3]
    %366 = vrot.lane.b32.xlu0 %v364, 66
    %v367 = vpop.permute.xlu0 %366
    %vm369 = vcmask 509408
    %370 = vst.msk [vmem:[#allocation7] sm:$0x3] %vm369, %v367
    %v371 = vld [vmem:[#allocation6 + $0x10] sm:$0x3]
    %373 = vrot.lane.b32.xlu0 %v371, 59
    %v374 = vpop.permute.xlu0 %373
    %vm376 = vcmask 534008
    %377 = vst.msk [vmem:[#allocation7] sm:$0x3] %vm376, %v374
    %v378 = vld [vmem:[#allocation6 + $0x14] sm:$0x3]
    %380 = vrot.lane.b32.xlu0 %v378, 125
    %v381 = vpop.permute.xlu0 %380
    %vm383 = vcmask 558608
    %384 = vst.msk [vmem:[#allocation7] sm:$0x3] %vm383, %v381
    %v385 = vld [vmem:[#allocation6 + $0x14] sm:$0x3]
    %387 = vrot.lane.b32.xlu0 %v385, 57
    %v388 = vpop.permute.xlu0 %387
    %vm390 = vcmask 583208
    %391 = vst.msk [vmem:[#allocation7] sm:$0x3] %vm390, %v388
    %v392 = vld [vmem:[#allocation6 + $0x16] sm:$0x3]
    %394 = vrot.lane.b32.xlu0 %v392, 103
    %v395 = vpop.permute.xlu0 %394
    %vm397 = vcmask 607808
    %398 = vst.msk [vmem:[#allocation7] sm:$0x3] %vm397, %v395
    %v399 = vld [vmem:[#allocation2] sm:$0x3]
    %401 = vrot.lane.b32.xlu0 %v399, 75
    %v402 = vpop.permute.xlu0 %401
    %vm404 = vcmask 632408
    %405 = vst.msk [vmem:[#allocation7] sm:$0x3] %vm404, %v402
    %406 = vrot.lane.b32.xlu0 %v399, 78
    %v407 = vpop.permute.xlu0 %406
    %vm409 = vcmask 657008
    %410 = vst.msk [vmem:[#allocation7] sm:$0x3] %vm409, %v407
    %411 = vrot.lane.b32.xlu0 %v399, 81
    %v412 = vpop.permute.xlu0 %411
    %vm414 = vcmask 681608
    %415 = vst.msk [vmem:[#allocation7] sm:$0x3] %vm414, %v412
    %416 = vrot.lane.b32.xlu0 %v399, 84
    %v417 = vpop.permute.xlu0 %416
    %vm419 = vcmask 706208
    %420 = vst.msk [vmem:[#allocation7] sm:$0x3] %vm419, %v417
    %421 = vrot.lane.b32.xlu0 %v399, 87
    %v422 = vpop.permute.xlu0 %421
    %vm424 = vcmask 730808
    %425 = vst.msk [vmem:[#allocation7] sm:$0x3] %vm424, %v422
    %426 = vrot.lane.b32.xlu0 %v399, 90
    %v427 = vpop.permute.xlu0 %426
    %vm429 = vcmask 755408
    %430 = vst.msk [vmem:[#allocation7] sm:$0x3] %vm429, %v427
    %431 = vrot.lane.b32.xlu0 %v399, 93
    %v432 = vpop.permute.xlu0 %431
    %vm434 = vcmask 780008
    %435 = vst.msk [vmem:[#allocation7] sm:$0x3] %vm434, %v432
    %436 = vrot.lane.b32.xlu0 %v399, 4
    %v437 = vpop.permute.xlu0 %436
    %vm439 = vcmask 50208
    %440 = vst.msk [vmem:[#allocation7 + $0x2] sm:$0x3] %vm439, %v437
    %441 = vrot.lane.b32.xlu0 %v399, 7
    %v442 = vpop.permute.xlu0 %441
    %vm444 = vcmask 74808
    %445 = vst.msk [vmem:[#allocation7 + $0x2] sm:$0x3] %vm444, %v442
    %v446 = vld [vmem:[#allocation4 + $0xe] sm:$0x3]
    %448 = vrot.lane.b32.xlu0 %v446, 4
    %v449 = vpop.permute.xlu0 %448
    %vm451 = vcmask 804608
    %452 = vst.msk [vmem:[#allocation7] sm:$0x3] %vm451, %v449
    %v453 = vld [vmem:[#allocation4 + $0xa] sm:$0x3]
    %455 = vrot.lane.b32.xlu0 %v453, 15
    %v456 = vpop.permute.xlu0 %455
    %vm458 = vcmask 829208
    %459 = vst.msk [vmem:[#allocation7] sm:$0x3] %vm458, %v456
    %v460 = vld [vmem:[#allocation4] sm:$0x3]
    %462 = vrot.lane.b32.xlu0 %v460, 109
    %v463 = vpop.permute.xlu0 %462
    %vm465 = vcmask 853808
    %466 = vst.msk [vmem:[#allocation7] sm:$0x3] %vm465, %v463
    %v467 = vld [vmem:[#allocation4 + $0x6] sm:$0x3]
    %469 = vrot.lane.b32.xlu0 %v467, 38
    %v470 = vpop.permute.xlu0 %469
    %vm472 = vcmask 878408
    %473 = vst.msk [vmem:[#allocation7] sm:$0x3] %vm472, %v470
    %v474 = vld [vmem:[#allocation5 + $0xc] sm:$0x3]
    %476 = vrot.lane.b32.xlu0 %v474, 65
    %v477 = vpop.permute.xlu0 %476
    %vm479 = vcmask 903008
    %480 = vst.msk [vmem:[#allocation7] sm:$0x3] %vm479, %v477
    %v481 = vld [vmem:[#allocation5 + $0xc] sm:$0x3]
    %483 = vrot.lane.b32.xlu0 %v481, 56
    %v484 = vpop.permute.xlu0 %483
    %vm486 = vcmask 927608
    %487 = vst.msk [vmem:[#allocation7] sm:$0x3] %vm486, %v484
    %v488 = vld [vmem:[#allocation5] sm:$0x3]
    %490 = vrot.lane.b32.xlu0 %v488, 5
    %v491 = vpop.permute.xlu0 %490
    %vm493 = vcmask 952208
    %494 = vst.msk [vmem:[#allocation7] sm:$0x3] %vm493, %v491
    %v495 = vld [vmem:[#allocation5 + $0x6] sm:$0x3]
    %497 = vrot.lane.b32.xlu0 %v495, 62
    %v498 = vpop.permute.xlu0 %497
    %vm500 = vcmask 976808
    %501 = vst.msk [vmem:[#allocation7] sm:$0x3] %vm500, %v498
    %v502 = vld [vmem:[#allocation6 + $0x12] sm:$0x3]
    %504 = vrot.lane.b32.xlu0 %v502, 67
    %v505 = vpop.permute.xlu0 %504
    %vm507 = vcmask 1001408
    %508 = vst.msk [vmem:[#allocation7] sm:$0x3] %vm507, %v505
    %v509 = vld [vmem:[#allocation6 + $0x10] sm:$0x3]
    %511 = vrot.lane.b32.xlu0 %v509, 53
    %v512 = vpop.permute.xlu0 %511
    %vm514 = vcmask 1026008
    %515 = vst.msk [vmem:[#allocation7] sm:$0x3] %vm514, %v512
    %v516 = vld [vmem:[#allocation6 + $0xa] sm:$0x3]
    %518 = vrot.lane.b32.xlu0 %v516, 74
    %v519 = vpop.permute.xlu0 %518
    %v520 = vrot.slane %v519, 6
    %vm521 = vcmask 605184
    %v522 = vsel %vm521, %v520, %v519
    %vm524 = vcmask 1042416
    %vm525 = vcmask 3074
    %vm526 = vmor %vm525, %vm524
    %527 = vst.msk [vmem:[#allocation7] sm:$0xf] %vm526, %v522
    %v528 = vld [vmem:[#allocation6 + $0xe] sm:$0x3]
    %530 = vrot.lane.b32.xlu0 %v528, 126
    %v531 = vpop.permute.xlu0 %530
    %vm533 = vcmask 25608
    %534 = vst.msk [vmem:[#allocation7 + $0x2] sm:$0x3] %vm533, %v531
  $region57: #{tpu_custom_call.1} parent=0 // pred_fallthru
    _
  %p535 = scmp.eq.s32.totalorder %s13, 1
  // Predicated region
  $region58: #{tpu_custom_call.1} parent=0 // pred_check
    %p536 = pneg %p535
  $region59: #{tpu_custom_call.1} parent=0 // pred_check_branch
    %538 = sbr.rel (%p536) target = $region61
  $region60: #{tpu_custom_call.1} parent=0 // pred_region
    %s539 = scalar_lea.vmem [#allocation3], 22
    %v540 = vld [vmem:[%s539] sm:$0x3]
    %542 = vrot.lane.b32.xlu0 %v540, 78
    %v543 = vpop.permute.xlu0 %542
    %vm545 = vcmask 17408
    %546 = vst.msk [vmem:[#allocation7] sm:$0x3] %vm545, %v543
    %v547 = vld [vmem:[%s539 + $0x6] sm:$0x3]
    %549 = vrot.lane.b32.xlu0 %v547, 45
    %v550 = vpop.permute.xlu0 %549
    %vm552 = vcmask 42008
    %553 = vst.msk [vmem:[#allocation7] sm:$0x3] %vm552, %v550
    %v554 = vld [vmem:[%s539 + $0x8] sm:$0x3]
    %556 = vrot.lane.b32.xlu0 %v554, 119
    %v557 = vpop.permute.xlu0 %556
    %vm559 = vcmask 66608
    %560 = vst.msk [vmem:[#allocation7] sm:$0x3] %vm559, %v557
    %v561 = vld [vmem:[%s539 + $0xe] sm:$0x3]
    %vm562 = vcmask 91208
    %563 = vst.msk [vmem:[#allocation7] sm:$0x3] %vm562, %v561
    %v564 = vld [vmem:[%s539 + $0x4] sm:$0xf]
    %566 = vrot.lane.b32.xlu0 %v564, 13
    %v567 = vpop.permute.xlu0 %566
    %v568 = vrot.slane %v567, 2
    %vm569 = vcmask 105472
    %v570 = vsel %vm569, %v567, %v568
    %vm572 = vcmask 115808
    %573 = vst.msk [vmem:[#allocation7] sm:$0x3] %vm572, %v570
    %s574 = scalar_lea.vmem [#allocation2], 30
    %v575 = vld [vmem:[%s574 + $0x14] sm:$0x3]
    %577 = vrot.lane.b32.xlu0 %v575, 11
    %v578 = vpop.permute.xlu0 %577
    %vm580 = vcmask 140408
    %581 = vst.msk [vmem:[#allocation7] sm:$0x3] %vm580, %v578
    %v582 = vld [vmem:[%s574 + $0x8] sm:$0x3]
    %584 = vrot.lane.b32.xlu0 %v582, 121
    %v585 = vpop.permute.xlu0 %584
    %vm587 = vcmask 165008
    %588 = vst.msk [vmem:[#allocation7] sm:$0x3] %vm587, %v585
    %v589 = vld [vmem:[%s539 + $0x14] sm:$0x3]
    %591 = vrot.lane.b32.xlu0 %v589, 107
    %v592 = vpop.permute.xlu0 %591
    %vm594 = vcmask 189608
    %595 = vst.msk [vmem:[#allocation7] sm:$0x3] %vm594, %v592
    %s596 = scalar_lea.vmem [#allocation4], 20
    %v597 = vld [vmem:[%s596 + $0x8] sm:$0x3]
    %599 = vrot.lane.b32.xlu0 %v597, 69
    %v600 = vpop.permute.xlu0 %599
    %vm602 = vcmask 214208
    %603 = vst.msk [vmem:[#allocation7] sm:$0x3] %vm602, %v600
    %v604 = vld [vmem:[%s596 + $0xe] sm:$0x3]
    %606 = vrot.lane.b32.xlu0 %v604, 99
    %v607 = vpop.permute.xlu0 %606
    %vm609 = vcmask 238808
    %610 = vst.msk [vmem:[#allocation7] sm:$0x3] %vm609, %v607
    %v611 = vld [vmem:[%s596 + $0xe] sm:$0x3]
    %613 = vrot.lane.b32.xlu0 %v611, 111
    %v614 = vpop.permute.xlu0 %613
    %vm616 = vcmask 263408
    %617 = vst.msk [vmem:[#allocation7] sm:$0x3] %vm616, %v614
    %v618 = vld [vmem:[%s596 + $0x10] sm:$0x3]
    %620 = vrot.lane.b32.xlu0 %v618, 3
    %v621 = vpop.permute.xlu0 %620
    %vm623 = vcmask 288008
    %624 = vst.msk [vmem:[#allocation7] sm:$0x3] %vm623, %v621
    %v625 = vld [vmem:[%s574] sm:$0x3]
    %627 = vrot.lane.b32.xlu0 %v625, 107
    %v628 = vpop.permute.xlu0 %627
    %vm630 = vcmask 312608
    %631 = vst.msk [vmem:[#allocation7] sm:$0x3] %vm630, %v628
    %v632 = vld [vmem:[%s596 + $0x12] sm:$0x3]
    %634 = vrot.lane.b32.xlu0 %v632, 79
    %v635 = vpop.permute.xlu0 %634
    %vm637 = vcmask 337208
    %638 = vst.msk [vmem:[#allocation7] sm:$0x3] %vm637, %v635
    %s639 = scalar_lea.vmem [#allocation5], 16
    %v640 = vld [vmem:[%s639 + $0x6] sm:$0x3]
    %642 = vrot.lane.b32.xlu0 %v640, 82
    %v643 = vpop.permute.xlu0 %642
    %vm645 = vcmask 361808
    %646 = vst.msk [vmem:[#allocation7] sm:$0x3] %vm645, %v643
    %v647 = vld [vmem:[%s639 + $0xe] sm:$0x3]
    %649 = vrot.lane.b32.xlu0 %v647, 25
    %v650 = vpop.permute.xlu0 %649
    %vm652 = vcmask 386408
    %653 = vst.msk [vmem:[#allocation7] sm:$0x3] %vm652, %v650
    %v654 = vld [vmem:[%s639 + $0x8] sm:$0x3]
    %656 = vrot.lane.b32.xlu0 %v654, 117
    %v657 = vpop.permute.xlu0 %656
    %vm659 = vcmask 411008
    %660 = vst.msk [vmem:[#allocation7] sm:$0x3] %vm659, %v657
    %v661 = vld [vmem:[%s639 + $0x8] sm:$0x3]
    %663 = vrot.lane.b32.xlu0 %v661, 87
    %v664 = vpop.permute.xlu0 %663
    %vm666 = vcmask 435608
    %667 = vst.msk [vmem:[#allocation7] sm:$0x3] %vm666, %v664
    %v668 = vld [vmem:[%s574 + $0x10] sm:$0x3]
    %670 = vrot.lane.b32.xlu0 %v668, 114
    %v671 = vpop.permute.xlu0 %670
    %vm673 = vcmask 460208
    %674 = vst.msk [vmem:[#allocation7] sm:$0x3] %vm673, %v671
    %v675 = vld [vmem:[%s574 + $0x1c] sm:$0x3]
    %677 = vrot.lane.b32.xlu0 %v675, 99
    %v678 = vpop.permute.xlu0 %677
    %vm680 = vcmask 484808
    %681 = vst.msk [vmem:[#allocation7] sm:$0x3] %vm680, %v678
    %s682 = scalar_lea.vmem [#allocation6], 24
    %v683 = vld [vmem:[%s682] sm:$0x3]
    %685 = vrot.lane.b32.xlu0 %v683, 66
    %v686 = vpop.permute.xlu0 %685
    %vm688 = vcmask 509408
    %689 = vst.msk [vmem:[#allocation7] sm:$0x3] %vm688, %v686
    %v690 = vld [vmem:[%s682 + $0x10] sm:$0x3]
    %692 = vrot.lane.b32.xlu0 %v690, 59
    %v693 = vpop.permute.xlu0 %692
    %vm695 = vcmask 534008
    %696 = vst.msk [vmem:[#allocation7] sm:$0x3] %vm695, %v693
    %v697 = vld [vmem:[%s682 + $0x14] sm:$0x3]
    %699 = vrot.lane.b32.xlu0 %v697, 125
    %v700 = vpop.permute.xlu0 %699
    %vm702 = vcmask 558608
    %703 = vst.msk [vmem:[#allocation7] sm:$0x3] %vm702, %v700
    %v704 = vld [vmem:[%s682 + $0x14] sm:$0x3]
    %706 = vrot.lane.b32.xlu0 %v704, 57
    %v707 = vpop.permute.xlu0 %706
    %vm709 = vcmask 583208
    %710 = vst.msk [vmem:[#allocation7] sm:$0x3] %vm709, %v707
    %v711 = vld [vmem:[%s682 + $0x16] sm:$0x3]
    %713 = vrot.lane.b32.xlu0 %v711, 103
    %v714 = vpop.permute.xlu0 %713
    %vm716 = vcmask 607808
    %717 = vst.msk [vmem:[#allocation7] sm:$0x3] %vm716, %v714
    %v718 = vld [vmem:[%s574] sm:$0x3]
    %720 = vrot.lane.b32.xlu0 %v718, 75
    %v721 = vpop.permute.xlu0 %720
    %vm723 = vcmask 632408
    %724 = vst.msk [vmem:[#allocation7] sm:$0x3] %vm723, %v721
    %725 = vrot.lane.b32.xlu0 %v718, 78
    %v726 = vpop.permute.xlu0 %725
    %vm728 = vcmask 657008
    %729 = vst.msk [vmem:[#allocation7] sm:$0x3] %vm728, %v726
    %730 = vrot.lane.b32.xlu0 %v718, 81
    %v731 = vpop.permute.xlu0 %730
    %vm733 = vcmask 681608
    %734 = vst.msk [vmem:[#allocation7] sm:$0x3] %vm733, %v731
    %735 = vrot.lane.b32.xlu0 %v718, 84
    %v736 = vpop.permute.xlu0 %735
    %vm738 = vcmask 706208
    %739 = vst.msk [vmem:[#allocation7] sm:$0x3] %vm738, %v736
    %740 = vrot.lane.b32.xlu0 %v718, 87
    %v741 = vpop.permute.xlu0 %740
    %vm743 = vcmask 730808
    %744 = vst.msk [vmem:[#allocation7] sm:$0x3] %vm743, %v741
    %745 = vrot.lane.b32.xlu0 %v718, 90
    %v746 = vpop.permute.xlu0 %745
    %vm748 = vcmask 755408
    %749 = vst.msk [vmem:[#allocation7] sm:$0x3] %vm748, %v746
    %750 = vrot.lane.b32.xlu0 %v718, 93
    %v751 = vpop.permute.xlu0 %750
    %vm753 = vcmask 780008
    %754 = vst.msk [vmem:[#allocation7] sm:$0x3] %vm753, %v751
    %755 = vrot.lane.b32.xlu0 %v718, 4
    %v756 = vpop.permute.xlu0 %755
    %vm758 = vcmask 50208
    %759 = vst.msk [vmem:[#allocation7 + $0x2] sm:$0x3] %vm758, %v756
    %760 = vrot.lane.b32.xlu0 %v718, 7
    %v761 = vpop.permute.xlu0 %760
    %vm763 = vcmask 74808
    %764 = vst.msk [vmem:[#allocation7 + $0x2] sm:$0x3] %vm763, %v761
    %v765 = vld [vmem:[%s596 + $0xe] sm:$0x3]
    %767 = vrot.lane.b32.xlu0 %v765, 4
    %v768 = vpop.permute.xlu0 %767
    %vm770 = vcmask 804608
    %771 = vst.msk [vmem:[#allocation7] sm:$0x3] %vm770, %v768
    %v772 = vld [vmem:[%s596 + $0xa] sm:$0x3]
    %774 = vrot.lane.b32.xlu0 %v772, 15
    %v775 = vpop.permute.xlu0 %774
    %vm777 = vcmask 829208
    %778 = vst.msk [vmem:[#allocation7] sm:$0x3] %vm777, %v775
    %v779 = vld [vmem:[%s596] sm:$0x3]
    %781 = vrot.lane.b32.xlu0 %v779, 109
    %v782 = vpop.permute.xlu0 %781
    %vm784 = vcmask 853808
    %785 = vst.msk [vmem:[#allocation7] sm:$0x3] %vm784, %v782
    %v786 = vld [vmem:[%s596 + $0x6] sm:$0x3]
    %788 = vrot.lane.b32.xlu0 %v786, 38
    %v789 = vpop.permute.xlu0 %788
    %vm791 = vcmask 878408
    %792 = vst.msk [vmem:[#allocation7] sm:$0x3] %vm791, %v789
    %v793 = vld [vmem:[%s639 + $0xc] sm:$0x3]
    %795 = vrot.lane.b32.xlu0 %v793, 65
    %v796 = vpop.permute.xlu0 %795
    %vm798 = vcmask 903008
    %799 = vst.msk [vmem:[#allocation7] sm:$0x3] %vm798, %v796
    %v800 = vld [vmem:[%s639 + $0xc] sm:$0x3]
    %802 = vrot.lane.b32.xlu0 %v800, 56
    %v803 = vpop.permute.xlu0 %802
    %vm805 = vcmask 927608
    %806 = vst.msk [vmem:[#allocation7] sm:$0x3] %vm805, %v803
    %v807 = vld [vmem:[%s639] sm:$0x3]
    %809 = vrot.lane.b32.xlu0 %v807, 5
    %v810 = vpop.permute.xlu0 %809
    %vm812 = vcmask 952208
    %813 = vst.msk [vmem:[#allocation7] sm:$0x3] %vm812, %v810
    %v814 = vld [vmem:[%s639 + $0x6] sm:$0x3]
    %816 = vrot.lane.b32.xlu0 %v814, 62
    %v817 = vpop.permute.xlu0 %816
    %vm819 = vcmask 976808
    %820 = vst.msk [vmem:[#allocation7] sm:$0x3] %vm819, %v817
    %v821 = vld [vmem:[%s682 + $0x12] sm:$0x3]
    %823 = vrot.lane.b32.xlu0 %v821, 67
    %v824 = vpop.permute.xlu0 %823
    %vm826 = vcmask 1001408
    %827 = vst.msk [vmem:[#allocation7] sm:$0x3] %vm826, %v824
    %v828 = vld [vmem:[%s682 + $0x10] sm:$0x3]
    %830 = vrot.lane.b32.xlu0 %v828, 53
    %v831 = vpop.permute.xlu0 %830
    %vm833 = vcmask 1026008
    %834 = vst.msk [vmem:[#allocation7] sm:$0x3] %vm833, %v831
    %v835 = vld [vmem:[%s682 + $0xa] sm:$0x3]
    %837 = vrot.lane.b32.xlu0 %v835, 74
    %v838 = vpop.permute.xlu0 %837
    %v839 = vrot.slane %v838, 6
    %vm840 = vcmask 605184
    %v841 = vsel %vm840, %v839, %v838
    %vm843 = vcmask 1042416
    %vm844 = vcmask 3074
    %vm845 = vmor %vm844, %vm843
    %846 = vst.msk [vmem:[#allocation7] sm:$0xf] %vm845, %v841
    %v847 = vld [vmem:[%s682 + $0xe] sm:$0x3]
    %849 = vrot.lane.b32.xlu0 %v847, 126
    %v850 = vpop.permute.xlu0 %849
    %vm852 = vcmask 25608
    %853 = vst.msk [vmem:[#allocation7 + $0x2] sm:$0x3] %vm852, %v850
  $region61: #{tpu_custom_call.1} parent=0 // pred_fallthru
    _
  %s854 = smul.u32 0, 2
  %p855 = scmp.lt.s32.totalorder %s854, 0
  %s856 = scalar_select %p855, %s854, 0
  %s857 = sshra.s32 %s856, 1
  %s858 = sand.u32 %s856, 1
  %s859 = smul.u32 %s857, 2
  %s860 = smul.addr %s859, 32
  %s861 = scalar_lea.hbm %s1, %s860
  // Predicated region
  $region62: #{tpu_custom_call.1} parent=0 // pred_check
    _
  $region63: #{tpu_custom_call.1} parent=0 // pred_check_branch
    %863 = sbr.rel target = $region65
  $region64: #{tpu_custom_call.1} parent=0 // pred_region
    %864 = sst [smem:[#allocation12]] [#allocation33]
    %865 = sst [smem:[#allocation13]] [#allocation32]
  $region65: #{tpu_custom_call.1} parent=0 // pred_fallthru
    _
  %867 = shalt.err (0)
  %s869 = sshll.u32 [#allocation7], 4
  %s870 = int_to_ptr.vmem [resolvable:$true] %s869
  %872 = dma.vmem_to_hbm [thread:$0]  %s870, 64, %s861, [#allocation9]
  // Predicated region
  $region66: #{tpu_custom_call.1} parent=0 // pred_check
    %p873 = pneg %p14
  $region67: #{tpu_custom_call.1} parent=0 // pred_check_branch
    %875 = sbr.rel (%p873) target = $region69
  $region68: #{tpu_custom_call.1} parent=0 // pred_region
    %s876 = smul.u32 %s197, 2
    %s877 = sshll.u32 %s876, 4
    %878 = dma.done [#allocation9], %s877
  $region69: #{tpu_custom_call.1} parent=0 // pred_fallthru
    _
  %879 = vsyncmov [#allocation8]
  %s880 = vpop.sfrf %879
  %p881 = scmp.eq.s32.totalorder %s880, 0
  %p882 = pneg %p881
  %884 = shalt.err (%p882)
  %s885 = scalar_lea.sflag [#allocation8], 1
  %886 = vsyncmov %s885
  %s887 = vpop.sfrf %886
  %p888 = scmp.eq.s32.totalorder %s887, 0
  %p889 = pneg %p888
  %891 = shalt.err (%p889)
  %s892 = scalar_lea.sflag [#allocation8], 2
  %893 = vsyncmov %s892
  %s894 = vpop.sfrf %893
  %p895 = scmp.eq.s32.totalorder %s894, 0
  %p896 = pneg %p895
  %898 = shalt.err (%p896)
  %s899 = scalar_lea.sflag [#allocation8], 3
  %900 = vsyncmov %s899
  %s901 = vpop.sfrf %900
  %p902 = scmp.eq.s32.totalorder %s901, 0
  %p903 = pneg %p902
  %905 = shalt.err (%p903)
  %s906 = scalar_lea.sflag [#allocation8], 4
  %907 = vsyncmov %s906
  %s908 = vpop.sfrf %907
  %p909 = scmp.eq.s32.totalorder %s908, 0
  %p910 = pneg %p909
  %912 = shalt.err (%p910)
  %s913 = scalar_lea.sflag [#allocation8], 5
  %914 = vsyncmov %s913
  %s915 = vpop.sfrf %914
  %p916 = scmp.eq.s32.totalorder %s915, 0
  %p917 = pneg %p916
  %919 = shalt.err (%p917)
  %s920 = scalar_lea.sflag [#allocation8], 6
  %921 = vsyncmov %s920
  %s922 = vpop.sfrf %921
  %p923 = scmp.eq.s32.totalorder %s922, 0
  %p924 = pneg %p923
  %926 = shalt.err (%p924)
  %s927 = scalar_lea.sflag [#allocation8], 7
  %928 = vsyncmov %s927
  %s929 = vpop.sfrf %928
  %p930 = scmp.eq.s32.totalorder %s929, 0
  %p931 = pneg %p930
  %933 = shalt.err (%p931)
  %s934 = scalar_lea.sflag [#allocation8], 8
  %935 = vsyncmov %s934
  %s936 = vpop.sfrf %935
  %p937 = scmp.eq.s32.totalorder %s936, 0
  %p938 = pneg %p937
  %940 = shalt.err (%p938)
  %s941 = scalar_lea.sflag [#allocation8], 9
  %942 = vsyncmov %s941
  %s943 = vpop.sfrf %942
  %p944 = scmp.eq.s32.totalorder %s943, 0
  %p945 = pneg %p944
  %947 = shalt.err (%p945)
  %948 = vsyncmov [#allocation9]
  %s949 = vpop.sfrf %948
  %p950 = scmp.eq.s32.totalorder %s949, 0
  %p951 = pneg %p950
  %953 = shalt.err (%p951)

</llo_original>
